<compile_context>
chip_gen: v7x
topology: tpu7x:2x2x1
jax: 0.10.0
libtpu: 0.0.40
codegen_flags: <defaults>
</compile_context>

<pallas_src>
import numpy as np
import jax
import jax.numpy as jnp
from jax import lax
from jax.experimental import pallas as pl
from jax.experimental.pallas import tpu as pltpu


# ------------------------------- Pallas kernel --------------------------------
def decoder_step_kernel(
    bt_ref,            # SMEM (T,) int32 : batch_size_t per step (scalar prefetch)
    enc_ref,           # (BT, P, Denc) bf16 : encoder features (time-invariant)
    enc_att_ref,       # (BT, P, A)   f32  : precomputed encoder_att(enc) + att biases
    emb_ref,           # (1, BT, 4Dd) f32  : precomputed embed@W_ih_emb + b_ih + b_hh
    h0_ref, c0_ref,    # (BT, Dd) f32      : initial hidden / cell state
    w_dec_att,         # (Dd, A)   bf16
    w_full, b_full,    # (1, A) f32, (1, 1) f32
    w_fbeta, b_fbeta,  # (Dd, Denc) bf16, (1, Denc) f32
    w_ih_awe,          # (Denc, 4Dd) bf16
    w_hh,              # (Dd, 4Dd)   bf16
    h_out_ref,         # out: (1, BT, Dd) f32
    alpha_ref,         # out: (1, BT, P)  f32
    h_scr, c_scr,      # scratch: (BT, Dd) f32
):
    b = pl.program_id(0)
    t = pl.program_id(1)

    # (re)initialize hidden/cell state at the first timestep of each batch tile
    @pl.when(t == 0)
    def _():
        h_scr[...] = h0_ref[...]
        c_scr[...] = c0_ref[...]

    h = h_scr[...]                                             # (BT, Dd) f32
    c = c_scr[...]
    hb = h.astype(jnp.bfloat16)

    BT, P, Denc = enc_ref.shape
    Dd = w_hh.shape[0]

    # ---------------- Attention (encoder branch precomputed) ----------------
    att2 = jnp.dot(hb, w_dec_att[...],
                   preferred_element_type=jnp.float32)          # (BT, A)
    att_pre = jnp.maximum(enc_att_ref[...] + att2[:, None, :], 0.0)   # ReLU, (BT, P, A)
    att = jnp.sum(att_pre * w_full[...][0], axis=-1) + b_full[0, 0]   # (BT, P)

    # softmax over pixels
    m = jnp.max(att, axis=-1, keepdims=True)
    e = jnp.exp(att - m)
    alpha = e * pl.reciprocal(jnp.sum(e, axis=-1, keepdims=True), approx=True)  # (BT, P)

    # attention-weighted encoding as a batched MXU contraction
    awe = jnp.einsum('bqp,bpd->bqd',
                     alpha[:, None, :].astype(jnp.bfloat16), enc_ref[...],
                     preferred_element_type=jnp.float32)[:, 0, :]     # (BT, Denc)

    gate = jax.nn.sigmoid(jnp.dot(hb, w_fbeta[...],
                                  preferred_element_type=jnp.float32)
                          + b_fbeta[...])                             # (BT, Denc)
    awe = gate * awe

    # ---------------- LSTM cell (embedding half + biases precomputed) -------
    gates = (emb_ref[0]
             + jnp.dot(awe.astype(jnp.bfloat16), w_ih_awe[...],
                       preferred_element_type=jnp.float32)
             + jnp.dot(hb, w_hh[...], preferred_element_type=jnp.float32))
    i_g = jax.nn.sigmoid(gates[:, 0 * Dd:1 * Dd])
    f_g = jax.nn.sigmoid(gates[:, 1 * Dd:2 * Dd])
    g_g = jnp.tanh(gates[:, 2 * Dd:3 * Dd])
    o_g = jax.nn.sigmoid(gates[:, 3 * Dd:4 * Dd])
    c_new = f_g * c + i_g * g_g
    h_new = o_g * jnp.tanh(c_new)

    # Only rows < batch_size_t are active this step (lengths sorted descending).
    bt = bt_ref[t]
    row = lax.broadcasted_iota(jnp.int32, (BT, 1), 0) + b * BT
    mask = row < bt                                                   # (BT, 1)

    h_upd = jnp.where(mask, h_new, h)
    c_upd = jnp.where(mask, c_new, c)
    h_scr[...] = h_upd
    c_scr[...] = c_upd
    h_out_ref[...] = h_upd[None, :, :]
    alpha_ref[...] = jnp.where(mask, alpha, 0.0)[None, :, :]


# ------------------------------- Wrapper ---------------------------------------
def _const_spec(shape):
    nd = len(shape)
    return pl.BlockSpec(shape, lambda *_: (0,) * nd)


def decoder_with_attention_forward(params, encoder_out, encoded_captions,
                                   caption_lengths, batch_tile=8):
    """Mirrors DecoderWithAttention.forward (use_sampling=False, data_parallel=False)."""
    f32, bf16 = jnp.float32, jnp.bfloat16

    B = encoder_out.shape[0]
    encoder_dim = encoder_out.shape[1]                       # torch: encoder_out.size(1)
    enc = encoder_out.reshape(B, -1, encoder_dim).astype(f32)  # torch .view semantics
    P = enc.shape[1]

    # sort by caption length (descending), as in torch
    lens = jnp.squeeze(caption_lengths, axis=0)              # (B,), torch .squeeze(0)
    sort_ind = jnp.argsort(-lens)
    lens_sorted = lens[sort_ind]
    if B != 1:
        enc = enc[sort_ind]
        encoded_captions = encoded_captions[sort_ind]

    T_seq = encoded_captions.shape[1]                        # STATIC grid extent
    E = params["embedding"].shape[1]
    Dd = params["w_hh"].shape[1]
    A = params["w_enc_att"].shape[0]
    V = params["w_fc"].shape[0]

    # pad batch up to a multiple of the batch tile (>= 8 sublanes)
    BT = batch_tile
    Bp = ((B + BT - 1) // BT) * BT
    nb = Bp // BT
    enc_pad = jnp.pad(enc, ((0, Bp - B), (0, 0), (0, 0)))

    # ---- time-invariant work hoisted out of the serial recurrence (one-shot XLA) ----
    mean_enc = jnp.mean(enc_pad, axis=1)                                     # (Bp, Denc)
    h0 = mean_enc @ params["w_init_h"].T.astype(f32) + params["b_init_h"]
    c0 = mean_enc @ params["w_init_c"].T.astype(f32) + params["b_init_c"]

    enc_att = (enc_pad.reshape(Bp * P, encoder_dim) @ params["w_enc_att"].T.astype(f32)
               + params["b_enc_att"] + params["b_dec_att"]).reshape(Bp, P, A)

    embeddings = params["embedding"][encoded_captions].astype(f32)           # (B, T, E)
    emb_pad = jnp.pad(embeddings, ((0, Bp - B), (0, 0), (0, 0)))
    w_ih = params["w_ih"].astype(f32)
    w_ih_emb = w_ih[:, :E].T                                                 # (E, 4Dd)
    w_ih_awe = w_ih[:, E:].T                                                 # (Denc, 4Dd)
    emb_gates = (emb_pad.reshape(Bp * T_seq, E) @ w_ih_emb
                 + params["b_ih"] + params["b_hh"]).reshape(Bp, T_seq, 4 * Dd)
    emb_gates = jnp.transpose(emb_gates, (1, 0, 2))                          # (T, Bp, 4Dd)

    # per-step active-row counts (device-side; grid stays static)
    t_ids = jnp.arange(T_seq, dtype=jnp.int32)
    bt = jnp.sum(lens_sorted[None, :].astype(jnp.int32) > t_ids[:, None],
                 axis=1).astype(jnp.int32)                                    # (T_seq,)

    weights = (
        params["w_dec_att"].T.astype(bf16),                   # (Dd, A)
        params["w_full"].astype(f32),                         # (1, A)
        params["b_full"].reshape(1, 1).astype(f32),
        params["w_fbeta"].T.astype(bf16),                     # (Dd, Denc)
        params["b_fbeta"].reshape(1, -1).astype(f32),
        w_ih_awe.astype(bf16),                                # (Denc, 4Dd)
        params["w_hh"].T.astype(bf16),                        # (Dd, 4Dd)
    )

    in_specs = [
        pl.BlockSpec((BT, P, encoder_dim), lambda b, t, _bt: (b, 0, 0)),  # enc (bf16)
        pl.BlockSpec((BT, P, A),           lambda b, t, _bt: (b, 0, 0)),  # enc_att
        pl.BlockSpec((1, BT, 4 * Dd),      lambda b, t, _bt: (t, b, 0)),  # emb_gates step
        pl.BlockSpec((BT, Dd),             lambda b, t, _bt: (b, 0)),     # h0
        pl.BlockSpec((BT, Dd),             lambda b, t, _bt: (b, 0)),     # c0
    ] + [_const_spec(w.shape) for w in weights]

    out_specs = [
        pl.BlockSpec((1, BT, Dd), lambda b, t, _bt: (t, b, 0)),           # hidden states
        pl.BlockSpec((1, BT, P),  lambda b, t, _bt: (t, b, 0)),           # alphas
    ]

    grid_spec = pltpu.PrefetchScalarGridSpec(
        num_scalar_prefetch=1,
        grid=(nb, T_seq),
        in_specs=in_specs,
        out_specs=out_specs,
        scratch_shapes=[pltpu.VMEM((BT, Dd), f32),
                        pltpu.VMEM((BT, Dd), f32)],
    )

    h_all, alphas_tbp = pl.pallas_call(
        decoder_step_kernel,
        grid_spec=grid_spec,
        out_shape=(jax.ShapeDtypeStruct((T_seq, Bp, Dd), f32),
                   jax.ShapeDtypeStruct((T_seq, Bp, P), f32)),
        compiler_params=pltpu.CompilerParams(
            dimension_semantics=("parallel", "arbitrary"),
            vmem_limit_bytes=32 * 1024 * 1024,   # raise for production-size shapes
        ),
    )(bt, enc_pad.astype(bf16), enc_att, emb_gates, h0, c0, *weights)

    # ---- vocab projection ONCE over all timesteps (big, well-shaped matmul) ----
    # TODO(synk): nn.Dropout before fc treated as identity (eval-mode / deterministic).
    preds_tbv = (jnp.einsum('tbd,vd->tbv', h_all, params["w_fc"].astype(f32))
                 + params["b_fc"])
    step_mask = jnp.arange(Bp)[None, :] < bt[:, None]                        # (T, Bp)
    preds_tbv = jnp.where(step_mask[:, :, None], preds_tbv, 0.0)

    predictions_full = jnp.transpose(preds_tbv, (1, 0, 2))                   # (Bp, T, V)
    alphas_full = jnp.transpose(alphas_tbp, (1, 0, 2))                       # (Bp, T, P)

    # decode_lengths as a Python list (matches torch API; one small host read)
    lens_host = np.asarray(jax.device_get(lens_sorted)).reshape(-1)
    decode_lengths = [int(l) for l in lens_host]
    T_max = max(decode_lengths)

    predictions = predictions_full[:B, :T_max]                               # (B, T_max, V)
    alphas = alphas_full[:B, :T_max]                                         # (B, T_max, P)

    return predictions, encoded_captions, decode_lengths, alphas, sort_ind


# ------------------------------- Params -----------------------------------------
def init_params(key, attention_dim, embed_dim, decoder_dim, vocab_size, encoder_dim):
    ks = jax.random.split(key, 16)

    def u(k, shape, a=0.1):
        return jax.random.uniform(k, shape, jnp.float32, -a, a)

    return {
        "embedding": u(ks[0], (vocab_size, embed_dim)),                    # uniform(-0.1,0.1)
        "w_enc_att": u(ks[1], (attention_dim, encoder_dim)),
        "b_enc_att": u(ks[2], (attention_dim,)),
        "w_dec_att": u(ks[3], (attention_dim, decoder_dim)),
        "b_dec_att": u(ks[4], (attention_dim,)),
        "w_full":    u(ks[5], (1, attention_dim)),
        "b_full":    u(ks[6], (1,)),
        "w_init_h":  u(ks[7], (decoder_dim, encoder_dim)),
        "b_init_h":  u(ks[8], (decoder_dim,)),
        "w_init_c":  u(ks[9], (decoder_dim, encoder_dim)),
        "b_init_c":  u(ks[10], (decoder_dim,)),
        "w_fbeta":   u(ks[11], (encoder_dim, decoder_dim)),
        "b_fbeta":   u(ks[12], (encoder_dim,)),
        "w_ih":      u(ks[13], (4 * decoder_dim, embed_dim + encoder_dim)),
        "w_hh":      u(ks[14], (4 * decoder_dim, decoder_dim)),
        "b_ih":      jnp.zeros((4 * decoder_dim,), jnp.float32),
        "b_hh":      jnp.zeros((4 * decoder_dim,), jnp.float32),
        "w_fc":      u(ks[15], (vocab_size, decoder_dim)),                 # uniform(-0.1,0.1)
        "b_fc":      jnp.zeros((vocab_size,), jnp.float32),                # fc bias = 0
    }


# ------------------------------- Main --------------------------------------------
if __name__ == "__main__":
    B = 2
    encoder_dim = 32
    H = W = 4                 # num_pixels = 16 after view(B, -1, encoder_dim)
    attention_dim = 16
    embed_dim = 16
    decoder_dim = 32
    vocab_size = 48
    T = 8                     # max caption length

    key = jax.random.PRNGKey(0)
    k_par, k_enc, k_cap = jax.random.split(key, 3)

    params = init_params(k_par, attention_dim, embed_dim, decoder_dim,
                         vocab_size, encoder_dim)

    encoder_out = jax.random.normal(k_enc, (B, encoder_dim, H, W), jnp.float32)
    encoded_captions = jax.random.randint(k_cap, (B, T), 0, vocab_size, jnp.int32)
    caption_lengths = jnp.array([[5, 7]], dtype=jnp.int32)   # (1, B)

    outs = decoder_with_attention_forward(params, encoder_out,
                                          encoded_captions, caption_lengths)
    predictions, sorted_caps, decode_lengths, alphas, sort_ind = outs
    jax.block_until_ready(predictions)
    jax.block_until_ready(alphas)

    assert predictions.shape == (B, max(decode_lengths), vocab_size)
    assert alphas.shape == (B, max(decode_lengths), H * W)
    assert bool(jnp.all(jnp.isfinite(predictions)))
    assert bool(jnp.all(jnp.isfinite(alphas)))
    print("KERNEL_OK")
</pallas_src>

<mosaic_0001>
module attributes {stable_mosaic.version = 11 : i64} {
  func.func @decoder_step_kernel(%arg0: i32, %arg1: i32, %arg2: memref<8xi32, #tpu.memory_space<smem>>, %arg3: memref<8x16x32xbf16, #tpu.memory_space<vmem>>, %arg4: memref<8x16x16xf32, #tpu.memory_space<vmem>>, %arg5: memref<1x8x128xf32, #tpu.memory_space<vmem>>, %arg6: memref<8x32xf32, #tpu.memory_space<vmem>>, %arg7: memref<8x32xf32, #tpu.memory_space<vmem>>, %arg8: memref<32x16xbf16, #tpu.memory_space<vmem>>, %arg9: memref<1x16xf32, #tpu.memory_space<vmem>>, %arg10: memref<1x1xf32, #tpu.memory_space<vmem>>, %arg11: memref<32x32xbf16, #tpu.memory_space<vmem>>, %arg12: memref<1x32xf32, #tpu.memory_space<vmem>>, %arg13: memref<32x128xbf16, #tpu.memory_space<vmem>>, %arg14: memref<32x128xbf16, #tpu.memory_space<vmem>>, %arg15: memref<1x8x32xf32, #tpu.memory_space<vmem>>, %arg16: memref<1x8x16xf32, #tpu.memory_space<vmem>>, %arg17: memref<8x32xf32, #tpu.memory_space<vmem>>, %arg18: memref<8x32xf32, #tpu.memory_space<vmem>>) attributes {dimension_semantics = [#tpu.dimension_semantics<parallel>, #tpu.dimension_semantics<arbitrary>], iteration_bounds = array<i64: 1, 8>, scalar_prefetch = 1 : i64, scratch_operands = 2 : i64, tpu.core_type = #tpu.core_type<tc>, window_params = [{transform_indices = @transform_0, window_bounds = array<i64: 8, 16, 32>}, {transform_indices = @transform_1, window_bounds = array<i64: 8, 16, 16>}, {transform_indices = @transform_2, window_bounds = array<i64: 1, 8, 128>}, {transform_indices = @transform_3, window_bounds = array<i64: 8, 32>}, {transform_indices = @transform_4, window_bounds = array<i64: 8, 32>}, {pipeline_mode = #tpu.pipeline_mode<synchronous>, transform_indices = @transform_5, window_bounds = array<i64: 32, 16>}, {pipeline_mode = #tpu.pipeline_mode<synchronous>, transform_indices = @transform_6, window_bounds = array<i64: 1, 16>}, {pipeline_mode = #tpu.pipeline_mode<synchronous>, transform_indices = @transform_7, window_bounds = array<i64: 1, 1>}, {pipeline_mode = #tpu.pipeline_mode<synchronous>, transform_indices = @transform_8, window_bounds = array<i64: 32, 32>}, {pipeline_mode = #tpu.pipeline_mode<synchronous>, transform_indices = @transform_9, window_bounds = array<i64: 1, 32>}, {pipeline_mode = #tpu.pipeline_mode<synchronous>, transform_indices = @transform_10, window_bounds = array<i64: 32, 128>}, {pipeline_mode = #tpu.pipeline_mode<synchronous>, transform_indices = @transform_11, window_bounds = array<i64: 32, 128>}, {transform_indices = @transform_12, window_bounds = array<i64: 1, 8, 32>}, {transform_indices = @transform_13, window_bounds = array<i64: 1, 8, 16>}]} {
    %c0_i32 = arith.constant 0 : i32
    %0 = arith.cmpi eq, %arg1, %c0_i32 : i32
    %1 = arith.extui %0 : i1 to i32
    %c0_i32_0 = arith.constant 0 : i32
    %2 = arith.cmpi ne, %1, %c0_i32_0 : i32
    scf.if %2 {
      %c0_50 = arith.constant 0 : index
      %c0_51 = arith.constant 0 : index
      %108 = vector.load %arg6[%c0_50, %c0_51] : memref<8x32xf32, #tpu.memory_space<vmem>>, vector<8x32xf32>
      %c0_52 = arith.constant 0 : index
      %c0_53 = arith.constant 0 : index
      %109 = vector.load %arg17[%c0_52, %c0_53] : memref<8x32xf32, #tpu.memory_space<vmem>>, vector<8x32xf32>
      tpu.vector_store %arg17[%c0_52, %c0_53], %108 {strides = array<i32>} : memref<8x32xf32, #tpu.memory_space<vmem>>, vector<8x32xf32>,
      %c0_54 = arith.constant 0 : index
      %c0_55 = arith.constant 0 : index
      %110 = vector.load %arg7[%c0_54, %c0_55] : memref<8x32xf32, #tpu.memory_space<vmem>>, vector<8x32xf32>
      %c0_56 = arith.constant 0 : index
      %c0_57 = arith.constant 0 : index
      %111 = vector.load %arg18[%c0_56, %c0_57] : memref<8x32xf32, #tpu.memory_space<vmem>>, vector<8x32xf32>
      tpu.vector_store %arg18[%c0_56, %c0_57], %110 {strides = array<i32>} : memref<8x32xf32, #tpu.memory_space<vmem>>, vector<8x32xf32>,
    } else {
    }
    %c0 = arith.constant 0 : index
    %c0_1 = arith.constant 0 : index
    %3 = vector.load %arg17[%c0, %c0_1] : memref<8x32xf32, #tpu.memory_space<vmem>>, vector<8x32xf32>
    %c0_2 = arith.constant 0 : index
    %c0_3 = arith.constant 0 : index
    %4 = vector.load %arg18[%c0_2, %c0_3] : memref<8x32xf32, #tpu.memory_space<vmem>>, vector<8x32xf32>
    %5 = arith.truncf %3 : vector<8x32xf32> to vector<8x32xbf16>
    %c0_4 = arith.constant 0 : index
    %c0_5 = arith.constant 0 : index
    %6 = vector.load %arg8[%c0_4, %c0_5] : memref<32x16xbf16, #tpu.memory_space<vmem>>, vector<32x16xbf16>
    %cst = arith.constant dense<0.000000e+00> : vector<8x16xf32>
    %7 = tpu.matmul %5, %6, %cst {dimension_numbers = #tpu.dot_dimension_numbers<[1], [0], [0], [1], [0, 0, 1, 1], [], []>} : vector<8x32xbf16>, vector<32x16xbf16>, vector<8x16xf32> -> vector<8x16xf32>
    %c0_6 = arith.constant 0 : index
    %c0_7 = arith.constant 0 : index
    %c0_8 = arith.constant 0 : index
    %8 = vector.load %arg4[%c0_6, %c0_7, %c0_8] : memref<8x16x16xf32, #tpu.memory_space<vmem>>, vector<8x16x16xf32>
    %9 = vector.shape_cast %7 : vector<8x16xf32> to vector<8x1x16xf32>
    %10 = vector.broadcast %9 : vector<8x1x16xf32> to vector<8x16x16xf32>
    %11 = arith.addf %8, %10 : vector<8x16x16xf32>
    %cst_9 = arith.constant 0.000000e+00 : f32
    %12 = vector.broadcast %cst_9 : f32 to vector<8x16x16xf32>
    %13 = arith.maximumf %11, %12 : vector<8x16x16xf32>
    %c0_10 = arith.constant 0 : index
    %c0_11 = arith.constant 0 : index
    %14 = vector.load %arg9[%c0_10, %c0_11] : memref<1x16xf32, #tpu.memory_space<vmem>>, vector<1x16xf32>
    %15 = vector.shape_cast %14 : vector<1x16xf32> to vector<16xf32>
    %16 = vector.shape_cast %15 : vector<16xf32> to vector<1x1x16xf32>
    %17 = vector.broadcast %16 : vector<1x1x16xf32> to vector<8x16x16xf32>
    %18 = arith.mulf %13, %17 : vector<8x16x16xf32>
    %cst_12 = arith.constant dense<0.000000e+00> : vector<8x16xf32>
    %19 = vector.multi_reduction <add>, %18, %cst_12 [2] : vector<8x16x16xf32> to vector<8x16xf32>
    %c0_13 = arith.constant 0 : index
    %c0_14 = arith.constant 0 : index
    %20 = vector.load %arg10[%c0_13, %c0_14] : memref<1x1xf32, #tpu.memory_space<vmem>>, vector<1x1xf32>
    %21 = vector.extract %20[0, 0] : f32 from vector<1x1xf32>
    %22 = vector.broadcast %21 : f32 to vector<8x16xf32>
    %23 = arith.addf %19, %22 : vector<8x16xf32>
    %cst_15 = arith.constant dense<0xFF800000> : vector<8xf32>
    %24 = vector.multi_reduction <maximumf>, %23, %cst_15 [1] : vector<8x16xf32> to vector<8xf32>
    %25 = vector.shape_cast %24 : vector<8xf32> to vector<8x1xf32>
    %26 = vector.broadcast %25 : vector<8x1xf32> to vector<8x16xf32>
    %27 = arith.subf %23, %26 : vector<8x16xf32>
    %28 = math.exp %27 : vector<8x16xf32>
    %cst_16 = arith.constant dense<0.000000e+00> : vector<8xf32>
    %29 = vector.multi_reduction <add>, %28, %cst_16 [1] : vector<8x16xf32> to vector<8xf32>
    %30 = vector.shape_cast %29 : vector<8xf32> to vector<8x1xf32>
    %31 = tpu.reciprocal %30 {approx = true} : vector<8x1xf32> -> vector<8x1xf32>
    %32 = vector.broadcast %31 : vector<8x1xf32> to vector<8x16xf32>
    %33 = arith.mulf %28, %32 : vector<8x16xf32>
    %34 = vector.shape_cast %33 : vector<8x16xf32> to vector<8x1x16xf32>
    %35 = arith.truncf %34 : vector<8x1x16xf32> to vector<8x1x16xbf16>
    %c0_17 = arith.constant 0 : index
    %c0_18 = arith.constant 0 : index
    %c0_19 = arith.constant 0 : index
    %36 = vector.load %arg3[%c0_17, %c0_18, %c0_19] : memref<8x16x32xbf16, #tpu.memory_space<vmem>>, vector<8x16x32xbf16>
    "tpu.trace_start"() <{level = 10 : i32, message = "bqp,bpd->bqd"}> : () -> ()
    %cst_20 = arith.constant dense<0.000000e+00> : vector<8x1x32xf32>
    %37 = tpu.matmul %35, %36, %cst_20 {dimension_numbers = #tpu.dot_dimension_numbers<[2], [1], [1], [2], [0, 0, 0, 1, 1, 2], [0], [0]>} : vector<8x1x16xbf16>, vector<8x16x32xbf16>, vector<8x1x32xf32> -> vector<8x1x32xf32>
    "tpu.trace_stop"() : () -> ()
    %38 = vector.shape_cast %37 : vector<8x1x32xf32> to vector<8x32xf32>
    %c0_21 = arith.constant 0 : index
    %c0_22 = arith.constant 0 : index
    %39 = vector.load %arg11[%c0_21, %c0_22] : memref<32x32xbf16, #tpu.memory_space<vmem>>, vector<32x32xbf16>
    %cst_23 = arith.constant dense<0.000000e+00> : vector<8x32xf32>
    %40 = tpu.matmul %5, %39, %cst_23 {dimension_numbers = #tpu.dot_dimension_numbers<[1], [0], [0], [1], [0, 0, 1, 1], [], []>} : vector<8x32xbf16>, vector<32x32xbf16>, vector<8x32xf32> -> vector<8x32xf32>
    %c0_24 = arith.constant 0 : index
    %c0_25 = arith.constant 0 : index
    %41 = vector.load %arg12[%c0_24, %c0_25] : memref<1x32xf32, #tpu.memory_space<vmem>>, vector<1x32xf32>
    %42 = vector.broadcast %41 : vector<1x32xf32> to vector<8x32xf32>
    %43 = arith.addf %40, %42 : vector<8x32xf32>
    %44 = arith.negf %43 : vector<8x32xf32>
    %45 = math.exp %44 : vector<8x32xf32>
    %cst_26 = arith.constant 1.000000e+00 : f32
    %46 = vector.broadcast %cst_26 : f32 to vector<8x32xf32>
    %47 = arith.addf %46, %45 : vector<8x32xf32>
    %48 = arith.divf %46, %47 : vector<8x32xf32>
    %49 = arith.mulf %48, %38 : vector<8x32xf32>
    %c0_27 = arith.constant 0 : index
    %c0_28 = arith.constant 0 : index
    %c0_29 = arith.constant 0 : index
    %50 = vector.load %arg5[%c0_27, %c0_28, %c0_29] : memref<1x8x128xf32, #tpu.memory_space<vmem>>, vector<1x8x128xf32>
    %51 = vector.shape_cast %50 : vector<1x8x128xf32> to vector<8x128xf32>
    %52 = arith.truncf %49 : vector<8x32xf32> to vector<8x32xbf16>
    %c0_30 = arith.constant 0 : index
    %c0_31 = arith.constant 0 : index
    %53 = vector.load %arg13[%c0_30, %c0_31] : memref<32x128xbf16, #tpu.memory_space<vmem>>, vector<32x128xbf16>
    %cst_32 = arith.constant dense<0.000000e+00> : vector<8x128xf32>
    %54 = tpu.matmul %52, %53, %cst_32 {dimension_numbers = #tpu.dot_dimension_numbers<[1], [0], [0], [1], [0, 0, 1, 1], [], []>} : vector<8x32xbf16>, vector<32x128xbf16>, vector<8x128xf32> -> vector<8x128xf32>
    %55 = arith.addf %51, %54 : vector<8x128xf32>
    %c0_33 = arith.constant 0 : index
    %c0_34 = arith.constant 0 : index
    %56 = vector.load %arg14[%c0_33, %c0_34] : memref<32x128xbf16, #tpu.memory_space<vmem>>, vector<32x128xbf16>
    %cst_35 = arith.constant dense<0.000000e+00> : vector<8x128xf32>
    %57 = tpu.matmul %5, %56, %cst_35 {dimension_numbers = #tpu.dot_dimension_numbers<[1], [0], [0], [1], [0, 0, 1, 1], [], []>} : vector<8x32xbf16>, vector<32x128xbf16>, vector<8x128xf32> -> vector<8x128xf32>
    %58 = arith.addf %55, %57 : vector<8x128xf32>
    %59 = vector.extract_strided_slice %58 {offsets = [0, 0], sizes = [8, 32], strides = [1, 1]} : vector<8x128xf32> to vector<8x32xf32>
    %60 = arith.negf %59 : vector<8x32xf32>
    %61 = math.exp %60 : vector<8x32xf32>
    %cst_36 = arith.constant 1.000000e+00 : f32
    %62 = vector.broadcast %cst_36 : f32 to vector<8x32xf32>
    %63 = arith.addf %62, %61 : vector<8x32xf32>
    %64 = arith.divf %62, %63 : vector<8x32xf32>
    %65 = vector.extract_strided_slice %58 {offsets = [0, 32], sizes = [8, 32], strides = [1, 1]} : vector<8x128xf32> to vector<8x32xf32>
    %66 = arith.negf %65 : vector<8x32xf32>
    %67 = math.exp %66 : vector<8x32xf32>
    %cst_37 = arith.constant 1.000000e+00 : f32
    %68 = vector.broadcast %cst_37 : f32 to vector<8x32xf32>
    %69 = arith.addf %68, %67 : vector<8x32xf32>
    %70 = arith.divf %68, %69 : vector<8x32xf32>
    %71 = vector.extract_strided_slice %58 {offsets = [0, 64], sizes = [8, 32], strides = [1, 1]} : vector<8x128xf32> to vector<8x32xf32>
    %72 = math.tanh %71 : vector<8x32xf32>
    %73 = vector.extract_strided_slice %58 {offsets = [0, 96], sizes = [8, 32], strides = [1, 1]} : vector<8x128xf32> to vector<8x32xf32>
    %74 = arith.negf %73 : vector<8x32xf32>
    %75 = math.exp %74 : vector<8x32xf32>
    %cst_38 = arith.constant 1.000000e+00 : f32
    %76 = vector.broadcast %cst_38 : f32 to vector<8x32xf32>
    %77 = arith.addf %76, %75 : vector<8x32xf32>
    %78 = arith.divf %76, %77 : vector<8x32xf32>
    %79 = arith.mulf %70, %4 : vector<8x32xf32>
    %80 = arith.mulf %64, %72 : vector<8x32xf32>
    %81 = arith.addf %79, %80 : vector<8x32xf32>
    %82 = math.tanh %81 : vector<8x32xf32>
    %83 = arith.mulf %78, %82 : vector<8x32xf32>
    %84 = arith.index_cast %arg1 : i32 to index
    %85 = memref.load %arg2[%84] : memref<8xi32, #tpu.memory_space<smem>>
    %86 = tpu.iota {dimensions = array<i32: 0>} : vector<8x1xi32>
    %c8_i32 = arith.constant 8 : i32
    %87 = arith.muli %arg0, %c8_i32 : i32
    %88 = vector.broadcast %87 : i32 to vector<8x1xi32>
    %89 = arith.addi %86, %88 : vector<8x1xi32>
    %90 = vector.broadcast %85 : i32 to vector<8x1xi32>
    %91 = arith.cmpi slt, %89, %90 : vector<8x1xi32>
    %92 = vector.shape_cast %91 : vector<8x1xi1> to vector<8x1xi1>
    %93 = vector.broadcast %92 : vector<8x1xi1> to vector<8x32xi1>
    %94 = arith.select %93, %83, %3 : vector<8x32xi1>, vector<8x32xf32>
    %95 = vector.shape_cast %91 : vector<8x1xi1> to vector<8x1xi1>
    %96 = vector.broadcast %95 : vector<8x1xi1> to vector<8x32xi1>
    %97 = arith.select %96, %81, %4 : vector<8x32xi1>, vector<8x32xf32>
    %c0_39 = arith.constant 0 : index
    %c0_40 = arith.constant 0 : index
    %98 = vector.load %arg17[%c0_39, %c0_40] : memref<8x32xf32, #tpu.memory_space<vmem>>, vector<8x32xf32>
    tpu.vector_store %arg17[%c0_39, %c0_40], %94 {strides = array<i32>} : memref<8x32xf32, #tpu.memory_space<vmem>>, vector<8x32xf32>,
    %c0_41 = arith.constant 0 : index
    %c0_42 = arith.constant 0 : index
    %99 = vector.load %arg18[%c0_41, %c0_42] : memref<8x32xf32, #tpu.memory_space<vmem>>, vector<8x32xf32>
    tpu.vector_store %arg18[%c0_41, %c0_42], %97 {strides = array<i32>} : memref<8x32xf32, #tpu.memory_space<vmem>>, vector<8x32xf32>,
    %100 = vector.shape_cast %94 : vector<8x32xf32> to vector<1x8x32xf32>
    %c0_43 = arith.constant 0 : index
    %c0_44 = arith.constant 0 : index
    %c0_45 = arith.constant 0 : index
    %101 = vector.load %arg15[%c0_43, %c0_44, %c0_45] : memref<1x8x32xf32, #tpu.memory_space<vmem>>, vector<1x8x32xf32>
    tpu.vector_store %arg15[%c0_43, %c0_44, %c0_45], %100 {strides = array<i32>} : memref<1x8x32xf32, #tpu.memory_space<vmem>>, vector<1x8x32xf32>,
    %cst_46 = arith.constant 0.000000e+00 : f32
    %102 = vector.shape_cast %91 : vector<8x1xi1> to vector<8x1xi1>
    %103 = vector.broadcast %102 : vector<8x1xi1> to vector<8x16xi1>
    %104 = vector.broadcast %cst_46 : f32 to vector<8x16xf32>
    %105 = arith.select %103, %33, %104 : vector<8x16xi1>, vector<8x16xf32>
    %106 = vector.shape_cast %105 : vector<8x16xf32> to vector<1x8x16xf32>
    %c0_47 = arith.constant 0 : index
    %c0_48 = arith.constant 0 : index
    %c0_49 = arith.constant 0 : index
    %107 = vector.load %arg16[%c0_47, %c0_48, %c0_49] : memref<1x8x16xf32, #tpu.memory_space<vmem>>, vector<1x8x16xf32>
    tpu.vector_store %arg16[%c0_47, %c0_48, %c0_49], %106 {strides = array<i32>} : memref<1x8x16xf32, #tpu.memory_space<vmem>>, vector<1x8x16xf32>,
    return
  }
  func.func @transform_0(%arg0: i32, %arg1: i32, %arg2: memref<8xi32, #tpu.memory_space<smem>>) -> (i32, i32, i32) {
    %c0_i32 = arith.constant 0 : i32
    %c0_i32_0 = arith.constant 0 : i32
    %c0_i32_1 = arith.constant 0 : i32
    return %arg0, %c0_i32, %c0_i32_0 : i32, i32, i32
  }
  func.func @transform_1(%arg0: i32, %arg1: i32, %arg2: memref<8xi32, #tpu.memory_space<smem>>) -> (i32, i32, i32) {
    %c0_i32 = arith.constant 0 : i32
    %c0_i32_0 = arith.constant 0 : i32
    %c0_i32_1 = arith.constant 0 : i32
    return %arg0, %c0_i32, %c0_i32_0 : i32, i32, i32
  }
  func.func @transform_2(%arg0: i32, %arg1: i32, %arg2: memref<8xi32, #tpu.memory_space<smem>>) -> (i32, i32, i32) {
    %c0_i32 = arith.constant 0 : i32
    %c0_i32_0 = arith.constant 0 : i32
    return %arg1, %arg0, %c0_i32 : i32, i32, i32
  }
  func.func @transform_3(%arg0: i32, %arg1: i32, %arg2: memref<8xi32, #tpu.memory_space<smem>>) -> (i32, i32) {
    %c0_i32 = arith.constant 0 : i32
    %c0_i32_0 = arith.constant 0 : i32
    return %arg0, %c0_i32 : i32, i32
  }
  func.func @transform_4(%arg0: i32, %arg1: i32, %arg2: memref<8xi32, #tpu.memory_space<smem>>) -> (i32, i32) {
    %c0_i32 = arith.constant 0 : i32
    %c0_i32_0 = arith.constant 0 : i32
    return %arg0, %c0_i32 : i32, i32
  }
  func.func @transform_5(%arg0: i32, %arg1: i32, %arg2: memref<8xi32, #tpu.memory_space<smem>>) -> (i32, i32) {
    %c0_i32 = arith.constant 0 : i32
    %c0_i32_0 = arith.constant 0 : i32
    %c0_i32_1 = arith.constant 0 : i32
    return %c0_i32, %c0_i32_0 : i32, i32
  }
  func.func @transform_6(%arg0: i32, %arg1: i32, %arg2: memref<8xi32, #tpu.memory_space<smem>>) -> (i32, i32) {
    %c0_i32 = arith.constant 0 : i32
    %c0_i32_0 = arith.constant 0 : i32
    %c0_i32_1 = arith.constant 0 : i32
    return %c0_i32, %c0_i32_0 : i32, i32
  }
  func.func @transform_7(%arg0: i32, %arg1: i32, %arg2: memref<8xi32, #tpu.memory_space<smem>>) -> (i32, i32) {
    %c0_i32 = arith.constant 0 : i32
    %c0_i32_0 = arith.constant 0 : i32
    %c0_i32_1 = arith.constant 0 : i32
    return %c0_i32, %c0_i32_0 : i32, i32
  }
  func.func @transform_8(%arg0: i32, %arg1: i32, %arg2: memref<8xi32, #tpu.memory_space<smem>>) -> (i32, i32) {
    %c0_i32 = arith.constant 0 : i32
    %c0_i32_0 = arith.constant 0 : i32
    %c0_i32_1 = arith.constant 0 : i32
    return %c0_i32, %c0_i32_0 : i32, i32
  }
  func.func @transform_9(%arg0: i32, %arg1: i32, %arg2: memref<8xi32, #tpu.memory_space<smem>>) -> (i32, i32) {
    %c0_i32 = arith.constant 0 : i32
    %c0_i32_0 = arith.constant 0 : i32
    %c0_i32_1 = arith.constant 0 : i32
    return %c0_i32, %c0_i32_0 : i32, i32
  }
  func.func @transform_10(%arg0: i32, %arg1: i32, %arg2: memref<8xi32, #tpu.memory_space<smem>>) -> (i32, i32) {
    %c0_i32 = arith.constant 0 : i32
    %c0_i32_0 = arith.constant 0 : i32
    %c0_i32_1 = arith.constant 0 : i32
    return %c0_i32, %c0_i32_0 : i32, i32
  }
  func.func @transform_11(%arg0: i32, %arg1: i32, %arg2: memref<8xi32, #tpu.memory_space<smem>>) -> (i32, i32) {
    %c0_i32 = arith.constant 0 : i32
    %c0_i32_0 = arith.constant 0 : i32
    %c0_i32_1 = arith.constant 0 : i32
    return %c0_i32, %c0_i32_0 : i32, i32
  }
  func.func @transform_12(%arg0: i32, %arg1: i32, %arg2: memref<8xi32, #tpu.memory_space<smem>>) -> (i32, i32, i32) {
    %c0_i32 = arith.constant 0 : i32
    %c0_i32_0 = arith.constant 0 : i32
    return %arg1, %arg0, %c0_i32 : i32, i32, i32
  }
  func.func @transform_13(%arg0: i32, %arg1: i32, %arg2: memref<8xi32, #tpu.memory_space<smem>>) -> (i32, i32, i32) {
    %c0_i32 = arith.constant 0 : i32
    %c0_i32_0 = arith.constant 0 : i32
    return %arg1, %arg0, %c0_i32 : i32, i32, i32
  }
}

</mosaic_0001>

<llo_original>
// kernel: tpu_custom_call.1
$region0: #{tpu_custom_call.1}
  #allocation0 [shape = 'u32[]', space=smem, size = 0x4, offset = 0x4, fixed_abs, tag = 'smem constant byte address 0x4 - core index']
  #allocation1 [shape = 'u32[144,128]{1,0:T(1,128)}', space=vmem, size = 0x12000, scoped, tag = 'internal scratch']
  #allocation2 [shape = 'f32[8,32]{1,0:T(8,128)}', space=vmem, size = 0x1000, scoped, tag = 'scratch operand']
  #allocation3 [shape = 'f32[8,32]{1,0:T(8,128)}', space=vmem, size = 0x1000, scoped, tag = 'scratch operand']
  #allocation4 [shape = 's32[1]{0}', space=sflag, size = 0x4, scoped, tag = 'scoped memory for tpu_custom_call.1']
  #allocation5 [shape = 'u8[512]{0}', space=smem, size = 0x200, scoped, tag = 'prefetched SMEM operand 0']
  #allocation6 [shape = 'f32[1,1]{1,0:T(1,128)S(1)}', space=vmem, size = 0x200, scoped, tag = 'scoped memory for tpu_custom_call.1']
  %s0 = inlined_call_operand.vmem [shape: s32[8], index: 0, kind: input, shape index: {}]
  %s1 = inlined_call_operand.hbm [shape: bf16[8,16,32], index: 1, kind: input, shape index: {}]
  %s2 = inlined_call_operand.hbm [shape: f32[8,16,16], index: 2, kind: input, shape index: {}]
  %s3 = inlined_call_operand.hbm [shape: f32[8,8,128], index: 3, kind: input, shape index: {}]
  %s4 = inlined_call_operand.hbm [shape: f32[8,32], index: 4, kind: input, shape index: {}]
  %s5 = inlined_call_operand.hbm [shape: f32[8,32], index: 5, kind: input, shape index: {}]
  %s6 = inlined_call_operand.vmem [shape: bf16[32,16], index: 6, kind: input, shape index: {}]
  %s7 = inlined_call_operand.vmem [shape: f32[1,16], index: 7, kind: input, shape index: {}]
  %s8 = inlined_call_operand.<no memory space> [shape: f32[1,1], index: 8, kind: input, shape index: {}]
  %s9 = inlined_call_operand.vmem [shape: bf16[32,32], index: 9, kind: input, shape index: {}]
  %s10 = inlined_call_operand.vmem [shape: f32[1,32], index: 10, kind: input, shape index: {}]
  %s11 = inlined_call_operand.vmem [shape: bf16[32,128], index: 11, kind: input, shape index: {}]
  %s12 = inlined_call_operand.vmem [shape: bf16[32,128], index: 12, kind: input, shape index: {}]
  %s13 = inlined_call_operand.hbm [shape: f32[8,8,32], index: 13, kind: output, shape index: {0}]
  %s14 = inlined_call_operand.hbm [shape: f32[8,8,16], index: 14, kind: output, shape index: {1}]
  %15 = xla_tuple %s13, %s14
  %s16 = sld [smem:[#allocation0]]
  $region113: #{tpu_custom_call.1} parent=0
    _
  %s18 = ssub.s32 1, %s16
  %s19 = scalar_select 0, %s18, %s16
  %s20 = sshll.u32 %s0, 4
  %s21 = int_to_ptr.vmem [resolvable:$true] %s20
  %23 = dma.vmem_to_smem %s21, 16, [#allocation5], [#allocation4]
  %v24 = vstv %s8
  %25 = vst [vmem:[#allocation6] sm:$0x1] %v24
  %26 = dma.done [#allocation4], 16
  %27 = sfence
  $region1: #{tpu_custom_call.1} parent=0
    #allocation7 [shape = 'u8[32768]{0}', space=vmem, size = 0x8000, scoped, tag = 'input window, operand 1, single buffered']
    #allocation8 [shape = 's32[2]{0}', space=sflag, size = 0x8, scoped, tag = 'scoped memory for tpu_custom_call.1']
    #allocation9 [shape = 's32[2]{0}', space=sflag, size = 0x8, scoped, tag = 'scoped memory for tpu_custom_call.1']
    #allocation10 [shape = 'u8[65536]{0}', space=vmem, size = 0x10000, scoped, tag = 'input window, operand 2, single buffered']
    #allocation11 [shape = 's32[1]{0}', space=sflag, size = 0x4, scoped, tag = 'scoped memory for tpu_custom_call.1']
    #allocation12 [shape = 'u8[8192]{0}', space=vmem, size = 0x2000, scoped, tag = 'input window, operand 3']
    #allocation13 [shape = 'u8[4096]{0}', space=vmem, size = 0x1000, scoped, tag = 'input window, operand 4, single buffered']
    #allocation14 [shape = 'u8[4096]{0}', space=vmem, size = 0x1000, scoped, tag = 'input window, operand 5, single buffered']
    #allocation15 [shape = 's32[1]{0}', space=sflag, size = 0x4, scoped, tag = 'scoped memory for tpu_custom_call.1']
    #allocation16 [shape = 'u8[8192]{0}', space=vmem, size = 0x2000, scoped, tag = 'output window, operand 0']
    #allocation17 [shape = 'u8[8192]{0}', space=vmem, size = 0x2000, scoped, tag = 'output window, operand 1']
    #allocation18 [shape = 's32[2]{0}', space=sflag, size = 0x8, scoped, tag = 'scoped memory for tpu_custom_call.1']
    %28 = vsyncpa [#allocation8], 0
    %29 = vsyncpa [#allocation11], 0
    %30 = vsyncpa [#allocation15], 0
    %31 = vsyncpa [#allocation9], 0
    %s32 = scalar_lea.sflag [#allocation9], 1
    %33 = vsyncpa %s32, 0
    %34 = vsyncpa [#allocation18], 0
    %s35 = scalar_lea.sflag [#allocation18], 1
    %36 = vsyncpa %s35, 0
    loop: start=0, step=1, limit=10
    $region2: #{tpu_custom_call.1} parent=1 // loop_pre_header
      _
    $region3: #{tpu_custom_call.1} parent=1 // loop_header
      %s38 = sphi 0, %s42
      %p39 = scmp.ge.s32.totalorder %s38, 10
      %s45 = sphi 0, %s57
      %s46 = sphi 0, %s53
      %s47 = sphi 0, %s45
      %s48 = sphi 0, %s46
      %s49 = sphi 0, %s47
      %s50 = sphi 0, %s48
      %s60 = sphi 0, %s62
      %s63 = sphi 0, %s60
      %s64 = sphi 0, %s63
      %s80 = sphi 0, %s64
      %s86 = sphi 0, %s88
      %s89 = sphi 0, %s86
      %s90 = sphi 0, %s89
      %s106 = sphi 0, %s90
      %s114 = sphi 0, %s116
      %s117 = sphi 0, %s114
      %s118 = sphi 0, %s117
      %s134 = sphi 0, %s118
      %s140 = sphi 0, %s142
      %s143 = sphi 0, %s140
      %s144 = sphi 0, %s143
      %s160 = sphi 0, %s144
      %s166 = sphi 0, %s168
      %s169 = sphi 0, %s166
      %s170 = sphi 0, %s169
      %s186 = sphi 0, %s170
      %s190 = sphi 0, %s190
      %s192 = sphi 0, %s190
      %s193 = sphi 0, %s192
      %s207 = sphi 0, %s193
      %s211 = sphi 0, %s211
      %s213 = sphi 0, %s211
      %s214 = sphi 0, %s213
      %s228 = sphi 0, %s214
      %s232 = sphi 0, %s232
      %s234 = sphi 0, %s232
      %s235 = sphi 0, %s234
      %s249 = sphi 0, %s235
      %s253 = sphi 0, %s253
      %s255 = sphi 0, %s253
      %s256 = sphi 0, %s255
      %s270 = sphi 0, %s256
      %s274 = sphi 0, %s274
      %s276 = sphi 0, %s274
      %s277 = sphi 0, %s276
      %s291 = sphi 0, %s277
      %s295 = sphi 0, %s295
      %s297 = sphi 0, %s295
      %s298 = sphi 0, %s297
      %s312 = sphi 0, %s298
      %s316 = sphi 0, %s316
      %s318 = sphi 0, %s316
      %s319 = sphi 0, %s318
      %s333 = sphi 0, %s319
      %s341 = sphi 0, %s343
      %s344 = sphi 0, %s341
      %s345 = sphi 0, %s344
      %s361 = sphi 0, %s345
      %s369 = sphi 0, %s371
      %s372 = sphi 0, %s369
      %s373 = sphi 0, %s372
      %s389 = sphi 0, %s373
    $region4: #{tpu_custom_call.1} parent=1 // loop_header_branch
      %41 = sbr.rel (%p39) target = $region8
    $region5: #{tpu_custom_call.1} parent=1 // loop_body
      %s43 = ssub.s32 %s38, 1
      %s44 = ssub.s32 %s38, 2
      %s51 = sadd.s32 1, %s46
      %p52 = scmp.ge.s32.totalorder %s51, 8
      %s53 = scalar_select %p52, 0, %s51
      %s54 = sadd.s32 1, %s45
      %s55 = scalar_select %p52, %s54, %s45
      %p56 = scmp.ge.s32.totalorder %s55, 1
      %s57 = scalar_select %p56, 0, %s55
      %s58 = ssub.s32 %s45, %s57
      %p59 = scmp.eq.s32.totalorder %s58, 0
      %s61 = sadd.s32 %s60, 1
      %s62 = scalar_select %p59, %s60, %s61
      %p65 = pneg %p59
      %p66 = scmp.eq.s32.totalorder %s38, 7
      %p67 = por %p65, %p66
      %p68 = scmp.ne.s32.totalorder %s60, %s63
      %p69 = scmp.eq.s32.totalorder %s38, 0
      %p70 = por %p68, %p69
      %p71 = scmp.ne.s32.totalorder %s60, %s63
      %p72 = scmp.eq.s32.totalorder %s43, 7
      %p73 = por %p71, %p72
      %p74 = scmp.ne.s32.totalorder %s63, %s64
      %p75 = scmp.eq.s32.totalorder %s43, 0
      %p76 = por %p74, %p75
      %p77 = scmp.ne.s32.totalorder %s63, %s64
      %p78 = scmp.eq.s32.totalorder %s44, 7
      %p79 = por %p77, %p78
      %p81 = scmp.ne.s32.totalorder %s64, %s80
      %p82 = scmp.eq.s32.totalorder %s44, 0
      %p83 = por %p81, %p82
      %s84 = ssub.s32 %s45, %s57
      %p85 = scmp.eq.s32.totalorder %s84, 0
      %s87 = sadd.s32 %s86, 1
      %s88 = scalar_select %p85, %s86, %s87
      %p91 = pneg %p85
      %p92 = scmp.eq.s32.totalorder %s38, 7
      %p93 = por %p91, %p92
      %p94 = scmp.ne.s32.totalorder %s86, %s89
      %p95 = scmp.eq.s32.totalorder %s38, 0
      %p96 = por %p94, %p95
      %p97 = scmp.ne.s32.totalorder %s86, %s89
      %p98 = scmp.eq.s32.totalorder %s43, 7
      %p99 = por %p97, %p98
      %p100 = scmp.ne.s32.totalorder %s89, %s90
      %p101 = scmp.eq.s32.totalorder %s43, 0
      %p102 = por %p100, %p101
      %p103 = scmp.ne.s32.totalorder %s89, %s90
      %p104 = scmp.eq.s32.totalorder %s44, 7
      %p105 = por %p103, %p104
      %p107 = scmp.ne.s32.totalorder %s90, %s106
      %p108 = scmp.eq.s32.totalorder %s44, 0
      %p109 = por %p107, %p108
      %s110 = ssub.s32 %s46, %s53
      %s111 = ssub.s32 %s45, %s57
      %s112 = sor.u32 %s110, %s111
      %p113 = scmp.eq.s32.totalorder %s112, 0
      %s115 = sadd.s32 %s114, 1
      %s116 = scalar_select %p113, %s114, %s115
      %p119 = pneg %p113
      %p120 = scmp.eq.s32.totalorder %s38, 7
      %p121 = por %p119, %p120
      %p122 = scmp.ne.s32.totalorder %s114, %s117
      %p123 = scmp.eq.s32.totalorder %s38, 0
      %p124 = por %p122, %p123
      %p125 = scmp.ne.s32.totalorder %s114, %s117
      %p126 = scmp.eq.s32.totalorder %s43, 7
      %p127 = por %p125, %p126
      %p128 = scmp.ne.s32.totalorder %s117, %s118
      %p129 = scmp.eq.s32.totalorder %s43, 0
      %p130 = por %p128, %p129
      %p131 = scmp.ne.s32.totalorder %s117, %s118
      %p132 = scmp.eq.s32.totalorder %s44, 7
      %p133 = por %p131, %p132
      %p135 = scmp.ne.s32.totalorder %s118, %s134
      %p136 = scmp.eq.s32.totalorder %s44, 0
      %p137 = por %p135, %p136
      %s138 = ssub.s32 %s45, %s57
      %p139 = scmp.eq.s32.totalorder %s138, 0
      %s141 = sadd.s32 %s140, 1
      %s142 = scalar_select %p139, %s140, %s141
      %p145 = pneg %p139
      %p146 = scmp.eq.s32.totalorder %s38, 7
      %p147 = por %p145, %p146
      %p148 = scmp.ne.s32.totalorder %s140, %s143
      %p149 = scmp.eq.s32.totalorder %s38, 0
      %p150 = por %p148, %p149
      %p151 = scmp.ne.s32.totalorder %s140, %s143
      %p152 = scmp.eq.s32.totalorder %s43, 7
      %p153 = por %p151, %p152
      %p154 = scmp.ne.s32.totalorder %s143, %s144
      %p155 = scmp.eq.s32.totalorder %s43, 0
      %p156 = por %p154, %p155
      %p157 = scmp.ne.s32.totalorder %s143, %s144
      %p158 = scmp.eq.s32.totalorder %s44, 7
      %p159 = por %p157, %p158
      %p161 = scmp.ne.s32.totalorder %s144, %s160
      %p162 = scmp.eq.s32.totalorder %s44, 0
      %p163 = por %p161, %p162
      %s164 = ssub.s32 %s45, %s57
      %p165 = scmp.eq.s32.totalorder %s164, 0
      %s167 = sadd.s32 %s166, 1
      %s168 = scalar_select %p165, %s166, %s167
      %p171 = pneg %p165
      %p172 = scmp.eq.s32.totalorder %s38, 7
      %p173 = por %p171, %p172
      %p174 = scmp.ne.s32.totalorder %s166, %s169
      %p175 = scmp.eq.s32.totalorder %s38, 0
      %p176 = por %p174, %p175
      %p177 = scmp.ne.s32.totalorder %s166, %s169
      %p178 = scmp.eq.s32.totalorder %s43, 7
      %p179 = por %p177, %p178
      %p180 = scmp.ne.s32.totalorder %s169, %s170
      %p181 = scmp.eq.s32.totalorder %s43, 0
      %p182 = por %p180, %p181
      %p183 = scmp.ne.s32.totalorder %s169, %s170
      %p184 = scmp.eq.s32.totalorder %s44, 7
      %p185 = por %p183, %p184
      %p187 = scmp.ne.s32.totalorder %s170, %s186
      %p188 = scmp.eq.s32.totalorder %s44, 0
      %p189 = por %p187, %p188
      %s191 = sadd.s32 %s190, 1
      %p194 = scmp.eq.s32.totalorder %s38, 7
      %p195 = scmp.ne.s32.totalorder %s190, %s192
      %p196 = scmp.eq.s32.totalorder %s38, 0
      %p197 = por %p195, %p196
      %p198 = scmp.ne.s32.totalorder %s190, %s192
      %p199 = scmp.eq.s32.totalorder %s43, 7
      %p200 = por %p198, %p199
      %p201 = scmp.ne.s32.totalorder %s192, %s193
      %p202 = scmp.eq.s32.totalorder %s43, 0
      %p203 = por %p201, %p202
      %p204 = scmp.ne.s32.totalorder %s192, %s193
      %p205 = scmp.eq.s32.totalorder %s44, 7
      %p206 = por %p204, %p205
      %p208 = scmp.ne.s32.totalorder %s193, %s207
      %p209 = scmp.eq.s32.totalorder %s44, 0
      %p210 = por %p208, %p209
      %s212 = sadd.s32 %s211, 1
      %p215 = scmp.eq.s32.totalorder %s38, 7
      %p216 = scmp.ne.s32.totalorder %s211, %s213
      %p217 = scmp.eq.s32.totalorder %s38, 0
      %p218 = por %p216, %p217
      %p219 = scmp.ne.s32.totalorder %s211, %s213
      %p220 = scmp.eq.s32.totalorder %s43, 7
      %p221 = por %p219, %p220
      %p222 = scmp.ne.s32.totalorder %s213, %s214
      %p223 = scmp.eq.s32.totalorder %s43, 0
      %p224 = por %p222, %p223
      %p225 = scmp.ne.s32.totalorder %s213, %s214
      %p226 = scmp.eq.s32.totalorder %s44, 7
      %p227 = por %p225, %p226
      %p229 = scmp.ne.s32.totalorder %s214, %s228
      %p230 = scmp.eq.s32.totalorder %s44, 0
      %p231 = por %p229, %p230
      %s233 = sadd.s32 %s232, 1
      %p236 = scmp.eq.s32.totalorder %s38, 7
      %p237 = scmp.ne.s32.totalorder %s232, %s234
      %p238 = scmp.eq.s32.totalorder %s38, 0
      %p239 = por %p237, %p238
      %p240 = scmp.ne.s32.totalorder %s232, %s234
      %p241 = scmp.eq.s32.totalorder %s43, 7
      %p242 = por %p240, %p241
      %p243 = scmp.ne.s32.totalorder %s234, %s235
      %p244 = scmp.eq.s32.totalorder %s43, 0
      %p245 = por %p243, %p244
      %p246 = scmp.ne.s32.totalorder %s234, %s235
      %p247 = scmp.eq.s32.totalorder %s44, 7
      %p248 = por %p246, %p247
      %p250 = scmp.ne.s32.totalorder %s235, %s249
      %p251 = scmp.eq.s32.totalorder %s44, 0
      %p252 = por %p250, %p251
      %s254 = sadd.s32 %s253, 1
      %p257 = scmp.eq.s32.totalorder %s38, 7
      %p258 = scmp.ne.s32.totalorder %s253, %s255
      %p259 = scmp.eq.s32.totalorder %s38, 0
      %p260 = por %p258, %p259
      %p261 = scmp.ne.s32.totalorder %s253, %s255
      %p262 = scmp.eq.s32.totalorder %s43, 7
      %p263 = por %p261, %p262
      %p264 = scmp.ne.s32.totalorder %s255, %s256
      %p265 = scmp.eq.s32.totalorder %s43, 0
      %p266 = por %p264, %p265
      %p267 = scmp.ne.s32.totalorder %s255, %s256
      %p268 = scmp.eq.s32.totalorder %s44, 7
      %p269 = por %p267, %p268
      %p271 = scmp.ne.s32.totalorder %s256, %s270
      %p272 = scmp.eq.s32.totalorder %s44, 0
      %p273 = por %p271, %p272
      %s275 = sadd.s32 %s274, 1
      %p278 = scmp.eq.s32.totalorder %s38, 7
      %p279 = scmp.ne.s32.totalorder %s274, %s276
      %p280 = scmp.eq.s32.totalorder %s38, 0
      %p281 = por %p279, %p280
      %p282 = scmp.ne.s32.totalorder %s274, %s276
      %p283 = scmp.eq.s32.totalorder %s43, 7
      %p284 = por %p282, %p283
      %p285 = scmp.ne.s32.totalorder %s276, %s277
      %p286 = scmp.eq.s32.totalorder %s43, 0
      %p287 = por %p285, %p286
      %p288 = scmp.ne.s32.totalorder %s276, %s277
      %p289 = scmp.eq.s32.totalorder %s44, 7
      %p290 = por %p288, %p289
      %p292 = scmp.ne.s32.totalorder %s277, %s291
      %p293 = scmp.eq.s32.totalorder %s44, 0
      %p294 = por %p292, %p293
      %s296 = sadd.s32 %s295, 1
      %p299 = scmp.eq.s32.totalorder %s38, 7
      %p300 = scmp.ne.s32.totalorder %s295, %s297
      %p301 = scmp.eq.s32.totalorder %s38, 0
      %p302 = por %p300, %p301
      %p303 = scmp.ne.s32.totalorder %s295, %s297
      %p304 = scmp.eq.s32.totalorder %s43, 7
      %p305 = por %p303, %p304
      %p306 = scmp.ne.s32.totalorder %s297, %s298
      %p307 = scmp.eq.s32.totalorder %s43, 0
      %p308 = por %p306, %p307
      %p309 = scmp.ne.s32.totalorder %s297, %s298
      %p310 = scmp.eq.s32.totalorder %s44, 7
      %p311 = por %p309, %p310
      %p313 = scmp.ne.s32.totalorder %s298, %s312
      %p314 = scmp.eq.s32.totalorder %s44, 0
      %p315 = por %p313, %p314
      %s317 = sadd.s32 %s316, 1
      %p320 = scmp.eq.s32.totalorder %s38, 7
      %p321 = scmp.ne.s32.totalorder %s316, %s318
      %p322 = scmp.eq.s32.totalorder %s38, 0
      %p323 = por %p321, %p322
      %p324 = scmp.ne.s32.totalorder %s316, %s318
      %p325 = scmp.eq.s32.totalorder %s43, 7
      %p326 = por %p324, %p325
      %p327 = scmp.ne.s32.totalorder %s318, %s319
      %p328 = scmp.eq.s32.totalorder %s43, 0
      %p329 = por %p327, %p328
      %p330 = scmp.ne.s32.totalorder %s318, %s319
      %p331 = scmp.eq.s32.totalorder %s44, 7
      %p332 = por %p330, %p331
      %p334 = scmp.ne.s32.totalorder %s319, %s333
      %p335 = scmp.eq.s32.totalorder %s44, 0
      %p336 = por %p334, %p335
      %s337 = ssub.s32 %s46, %s53
      %s338 = ssub.s32 %s45, %s57
      %s339 = sor.u32 %s337, %s338
      %p340 = scmp.eq.s32.totalorder %s339, 0
      %s342 = sadd.s32 %s341, 1
      %s343 = scalar_select %p340, %s341, %s342
      %p346 = pneg %p340
      %p347 = scmp.eq.s32.totalorder %s38, 7
      %p348 = por %p346, %p347
      %p349 = scmp.ne.s32.totalorder %s341, %s344
      %p350 = scmp.eq.s32.totalorder %s38, 0
      %p351 = por %p349, %p350
      %p352 = scmp.ne.s32.totalorder %s341, %s344
      %p353 = scmp.eq.s32.totalorder %s43, 7
      %p354 = por %p352, %p353
      %p355 = scmp.ne.s32.totalorder %s344, %s345
      %p356 = scmp.eq.s32.totalorder %s43, 0
      %p357 = por %p355, %p356
      %p358 = scmp.ne.s32.totalorder %s344, %s345
      %p359 = scmp.eq.s32.totalorder %s44, 7
      %p360 = por %p358, %p359
      %p362 = scmp.ne.s32.totalorder %s345, %s361
      %p363 = scmp.eq.s32.totalorder %s44, 0
      %p364 = por %p362, %p363
      %s365 = ssub.s32 %s46, %s53
      %s366 = ssub.s32 %s45, %s57
      %s367 = sor.u32 %s365, %s366
      %p368 = scmp.eq.s32.totalorder %s367, 0
      %s370 = sadd.s32 %s369, 1
      %s371 = scalar_select %p368, %s369, %s370
      %p374 = pneg %p368
      %p375 = scmp.eq.s32.totalorder %s38, 7
      %p376 = por %p374, %p375
      %p377 = scmp.ne.s32.totalorder %s369, %s372
      %p378 = scmp.eq.s32.totalorder %s38, 0
      %p379 = por %p377, %p378
      %p380 = scmp.ne.s32.totalorder %s369, %s372
      %p381 = scmp.eq.s32.totalorder %s43, 7
      %p382 = por %p380, %p381
      %p383 = scmp.ne.s32.totalorder %s372, %s373
      %p384 = scmp.eq.s32.totalorder %s43, 0
      %p385 = por %p383, %p384
      %p386 = scmp.ne.s32.totalorder %s372, %s373
      %p387 = scmp.eq.s32.totalorder %s44, 7
      %p388 = por %p386, %p387
      %p390 = scmp.ne.s32.totalorder %s373, %s389
      %p391 = scmp.eq.s32.totalorder %s44, 0
      %p392 = por %p390, %p391
      %p393 = scmp.le.s32.totalorder 1, %s38
      %p394 = scmp.lt.s32.totalorder %s38, 9
      %p395 = pnand %p393, %p394
      %p396 = pneg %p395
      // Predicated region
      $region9: #{tpu_custom_call.1} parent=5 // pred_check
        _
      $region10: #{tpu_custom_call.1} parent=5 // pred_check_branch
        %398 = sbr.rel (%p395) target = $region12
      $region11: #{tpu_custom_call.1} parent=5 // pred_region
        %s399 = ssub.s32 %s38, 1
        // Predicated region
        $region13: #{tpu_custom_call.1} parent=11 // pred_check
          %p400 = pneg %p76
        $region14: #{tpu_custom_call.1} parent=11 // pred_check_branch
          %402 = sbr.rel (%p400) target = $region16
        $region15: #{tpu_custom_call.1} parent=11 // pred_region
          %s403 = smul.u32 8, %s47
          %s405 = ssub.s32 1024, 1024
          %406 = vsyncadd [#allocation8], %s405
          %s407 = smul.addr %s403, 2
          %s408 = smul.addr %s407, 64
          %s409 = scalar_lea.hbm %s1, %s408
          %s410 = sshll.u32 [#allocation7], 4
          %s411 = int_to_ptr.vmem [resolvable:$true] %s410
          %416 = dma.hbm_to_vmem [thread:$0]  %s409, 1024, %s411, [#allocation8], 64, 64, 4
        $region16: #{tpu_custom_call.1} parent=11 // pred_fallthru
          _
        // Predicated region
        $region17: #{tpu_custom_call.1} parent=11 // pred_check
          %p417 = pneg %p102
        $region18: #{tpu_custom_call.1} parent=11 // pred_check_branch
          %419 = sbr.rel (%p417) target = $region20
        $region19: #{tpu_custom_call.1} parent=11 // pred_region
          %s420 = smul.u32 8, %s47
          %s422 = ssub.s32 2048, 2048
          %423 = vsyncadd [#allocation11], %s422
          %s424 = smul.addr %s420, 2
          %s425 = smul.addr %s424, 128
          %s426 = scalar_lea.hbm %s2, %s425
          %s427 = sshll.u32 [#allocation10], 4
          %s428 = int_to_ptr.vmem [resolvable:$true] %s427
          %433 = dma.hbm_to_vmem [thread:$0]  %s426, 2048, %s428, [#allocation11], 128, 128, 8
        $region20: #{tpu_custom_call.1} parent=11 // pred_fallthru
          _
        // Predicated region
        $region21: #{tpu_custom_call.1} parent=11 // pred_check
          %p434 = pneg %p156
        $region22: #{tpu_custom_call.1} parent=11 // pred_check_branch
          %436 = sbr.rel (%p434) target = $region24
        $region23: #{tpu_custom_call.1} parent=11 // pred_region
          %s438 = ssub.s32 128, 128
          %439 = vsyncadd [#allocation11], %s438
          %s440 = smul.addr %s47, 128
          %s441 = scalar_lea.hbm %s4, %s440
          %s443 = sshll.u32 [#allocation13], 4
          %s444 = int_to_ptr.vmem [resolvable:$true] %s443
          %446 = dma.hbm_to_vmem [thread:$0]  %s441, 128, %s444, [#allocation11]
        $region24: #{tpu_custom_call.1} parent=11 // pred_fallthru
          _
        // Predicated region
        $region25: #{tpu_custom_call.1} parent=11 // pred_check
          %p447 = pneg %p182
        $region26: #{tpu_custom_call.1} parent=11 // pred_check_branch
          %449 = sbr.rel (%p447) target = $region28
        $region27: #{tpu_custom_call.1} parent=11 // pred_region
          %s451 = ssub.s32 128, 128
          %452 = vsyncadd [#allocation15], %s451
          %s453 = smul.addr %s47, 128
          %s454 = scalar_lea.hbm %s5, %s453
          %s456 = sshll.u32 [#allocation14], 4
          %s457 = int_to_ptr.vmem [resolvable:$true] %s456
          %459 = dma.hbm_to_vmem [thread:$0]  %s454, 128, %s457, [#allocation15]
        $region28: #{tpu_custom_call.1} parent=11 // pred_fallthru
          _
        // Predicated region
        $region29: #{tpu_custom_call.1} parent=11 // pred_check
          %p460 = pneg %p203
        $region30: #{tpu_custom_call.1} parent=11 // pred_check_branch
          %462 = sbr.rel (%p460) target = $region32
        $region31: #{tpu_custom_call.1} parent=11 // pred_region
          _
        $region32: #{tpu_custom_call.1} parent=11 // pred_fallthru
          _
        // Predicated region
        $region33: #{tpu_custom_call.1} parent=11 // pred_check
          %p463 = pneg %p224
        $region34: #{tpu_custom_call.1} parent=11 // pred_check_branch
          %465 = sbr.rel (%p463) target = $region36
        $region35: #{tpu_custom_call.1} parent=11 // pred_region
          _
        $region36: #{tpu_custom_call.1} parent=11 // pred_fallthru
          _
        // Predicated region
        $region37: #{tpu_custom_call.1} parent=11 // pred_check
          %p466 = pneg %p245
        $region38: #{tpu_custom_call.1} parent=11 // pred_check_branch
          %468 = sbr.rel (%p466) target = $region40
        $region39: #{tpu_custom_call.1} parent=11 // pred_region
          _
        $region40: #{tpu_custom_call.1} parent=11 // pred_fallthru
          _
        // Predicated region
        $region41: #{tpu_custom_call.1} parent=11 // pred_check
          %p469 = pneg %p266
        $region42: #{tpu_custom_call.1} parent=11 // pred_check_branch
          %471 = sbr.rel (%p469) target = $region44
        $region43: #{tpu_custom_call.1} parent=11 // pred_region
          _
        $region44: #{tpu_custom_call.1} parent=11 // pred_fallthru
          _
        // Predicated region
        $region45: #{tpu_custom_call.1} parent=11 // pred_check
          %p472 = pneg %p287
        $region46: #{tpu_custom_call.1} parent=11 // pred_check_branch
          %474 = sbr.rel (%p472) target = $region48
        $region47: #{tpu_custom_call.1} parent=11 // pred_region
          _
        $region48: #{tpu_custom_call.1} parent=11 // pred_fallthru
          _
        // Predicated region
        $region49: #{tpu_custom_call.1} parent=11 // pred_check
          %p475 = pneg %p308
        $region50: #{tpu_custom_call.1} parent=11 // pred_check_branch
          %477 = sbr.rel (%p475) target = $region52
        $region51: #{tpu_custom_call.1} parent=11 // pred_region
          _
        $region52: #{tpu_custom_call.1} parent=11 // pred_fallthru
          _
        // Predicated region
        $region53: #{tpu_custom_call.1} parent=11 // pred_check
          %p478 = pneg %p329
        $region54: #{tpu_custom_call.1} parent=11 // pred_check_branch
          %480 = sbr.rel (%p478) target = $region56
        $region55: #{tpu_custom_call.1} parent=11 // pred_region
          _
        $region56: #{tpu_custom_call.1} parent=11 // pred_fallthru
          _
      $region12: #{tpu_custom_call.1} parent=5 // pred_fallthru
        _
      %p481 = scmp.lt.s32.totalorder %s38, 8
      // Predicated region
      $region57: #{tpu_custom_call.1} parent=5 // pred_check
        %p482 = pneg %p481
      $region58: #{tpu_custom_call.1} parent=5 // pred_check_branch
        %484 = sbr.rel (%p482) target = $region60
      $region59: #{tpu_custom_call.1} parent=5 // pred_region
        // Predicated region
        $region61: #{tpu_custom_call.1} parent=59 // pred_check
          %p485 = pneg %p124
        $region62: #{tpu_custom_call.1} parent=59 // pred_check_branch
          %487 = sbr.rel (%p485) target = $region64
        $region63: #{tpu_custom_call.1} parent=59 // pred_region
          %s488 = sand.u32 %s38, 1
          %s489 = scalar_lea.sflag [#allocation8], %s488
          %s490 = sand.u32 %s114, 1
          %s491 = smul.addr %s490, 8
          %s492 = scalar_lea.vmem [#allocation12], %s491
          %s494 = ssub.s32 128, 128
          %495 = vsyncadd %s489, %s494
          %s496 = sadd.s32 %s45, %s46
          %s497 = smul.addr %s496, 128
          %s498 = scalar_lea.hbm %s3, %s497
          %s500 = sshll.u32 %s492, 4
          %s501 = int_to_ptr.vmem [resolvable:$true] %s500
          %503 = dma.hbm_to_vmem [thread:$0]  %s498, 128, %s501, %s489
        $region64: #{tpu_custom_call.1} parent=59 // pred_fallthru
          _
      $region60: #{tpu_custom_call.1} parent=5 // pred_fallthru
        _
      %p504 = scmp.le.s32.totalorder 1, %s38
      %p505 = scmp.lt.s32.totalorder %s38, 9
      %p506 = pnand %p504, %p505
      %p507 = pneg %p506
      // Predicated region
      $region65: #{tpu_custom_call.1} parent=5 // pred_check
        _
      $region66: #{tpu_custom_call.1} parent=5 // pred_check_branch
        %509 = sbr.rel (%p506) target = $region68
      $region67: #{tpu_custom_call.1} parent=5 // pred_region
        %s510 = ssub.s32 %s38, 1
        // Predicated region
        $region69: #{tpu_custom_call.1} parent=67 // pred_check
          %p511 = pneg %p76
        $region70: #{tpu_custom_call.1} parent=67 // pred_check_branch
          %513 = sbr.rel (%p511) target = $region72
        $region71: #{tpu_custom_call.1} parent=67 // pred_region
          %514 = dma.done [#allocation8], 1024
        $region72: #{tpu_custom_call.1} parent=67 // pred_fallthru
          _
        // Predicated region
        $region73: #{tpu_custom_call.1} parent=67 // pred_check
          %p515 = pneg %p102
        $region74: #{tpu_custom_call.1} parent=67 // pred_check_branch
          %517 = sbr.rel (%p515) target = $region76
        $region75: #{tpu_custom_call.1} parent=67 // pred_region
          %518 = dma.done [#allocation11], 2048
        $region76: #{tpu_custom_call.1} parent=67 // pred_fallthru
          _
        %s519 = sand.u32 %s43, 1
        %s520 = scalar_lea.sflag [#allocation8], %s519
        %s521 = sand.u32 %s117, 1
        %s522 = smul.addr %s521, 8
        %s523 = scalar_lea.vmem [#allocation12], %s522
        // Predicated region
        $region77: #{tpu_custom_call.1} parent=67 // pred_check
          %p524 = pneg %p130
        $region78: #{tpu_custom_call.1} parent=67 // pred_check_branch
          %526 = sbr.rel (%p524) target = $region80
        $region79: #{tpu_custom_call.1} parent=67 // pred_region
          %527 = dma.done %s520, 128
        $region80: #{tpu_custom_call.1} parent=67 // pred_fallthru
          _
        // Predicated region
        $region81: #{tpu_custom_call.1} parent=67 // pred_check
          %p528 = pneg %p156
        $region82: #{tpu_custom_call.1} parent=67 // pred_check_branch
          %530 = sbr.rel (%p528) target = $region84
        $region83: #{tpu_custom_call.1} parent=67 // pred_region
          %531 = dma.done [#allocation11], 128
        $region84: #{tpu_custom_call.1} parent=67 // pred_fallthru
          _
        // Predicated region
        $region85: #{tpu_custom_call.1} parent=67 // pred_check
          %p532 = pneg %p182
        $region86: #{tpu_custom_call.1} parent=67 // pred_check_branch
          %534 = sbr.rel (%p532) target = $region88
        $region87: #{tpu_custom_call.1} parent=67 // pred_region
          %535 = dma.done [#allocation15], 128
        $region88: #{tpu_custom_call.1} parent=67 // pred_fallthru
          _
        %p536 = pneg %p76
        %p537 = pneg %p73
        %p538 = pneg %p102
        %p539 = pneg %p99
        %s540 = sand.u32 %s43, 1
        %s541 = scalar_lea.sflag [#allocation8], %s540
        %s542 = sand.u32 %s117, 1
        %s543 = smul.addr %s542, 8
        %s544 = scalar_lea.vmem [#allocation12], %s543
        %p545 = pneg %p130
        %p546 = pneg %p127
        %p547 = pneg %p156
        %p548 = pneg %p153
        %p549 = pneg %p182
        %p550 = pneg %p179
        %p551 = pneg %p203
        %p552 = pneg %p200
        %p553 = pneg %p224
        %p554 = pneg %p221
        %p555 = pneg %p245
        %p556 = pneg %p242
        %p557 = pneg %p266
        %p558 = pneg %p263
        %p559 = pneg %p287
        %p560 = pneg %p284
        %p561 = pneg %p308
        %p562 = pneg %p305
        %p563 = pneg %p329
        %p564 = pneg %p326
        %p565 = pneg %p357
        %p566 = pneg %p354
        %s567 = sand.u32 %s344, 1
        %s568 = scalar_lea.sflag [#allocation9], %s567
        %s569 = sand.u32 %s344, 1
        %s570 = smul.addr %s569, 8
        %s571 = scalar_lea.vmem [#allocation16], %s570
        %p572 = pneg %p385
        %p573 = pneg %p382
        %s574 = sand.u32 %s372, 1
        %s575 = scalar_lea.sflag [#allocation18], %s574
        %s576 = sand.u32 %s372, 1
        %s577 = smul.addr %s576, 8
        %s578 = scalar_lea.vmem [#allocation17], %s577
        %s579 = smul.u32 8, %s47
        %s580 = smul.u32 8, %s47
        %p582 = scmp.eq.s32.totalorder %s48, 0
        // Predicated region
        $region89: #{tpu_custom_call.1} parent=67 // pred_check
          %p583 = pneg %p582
        $region90: #{tpu_custom_call.1} parent=67 // pred_check_branch
          %585 = sbr.rel (%p583) target = $region92
        $region91: #{tpu_custom_call.1} parent=67 // pred_region
          %v586 = vld [vmem:[#allocation13] sm:$0xff]
          %vm587 = vcmask 261120
          %588 = vst.msk [vmem:[#allocation2] sm:$0xff] %vm587, %v586
          %v589 = vld [vmem:[#allocation14] sm:$0xff]
          %590 = vst.msk [vmem:[#allocation3] sm:$0xff] %vm587, %v589
        $region92: #{tpu_custom_call.1} parent=67 // pred_fallthru
          _
        %v591 = vld [vmem:[#allocation2] sm:$0xff]
        %v592 = vld [vmem:[#allocation3] sm:$0xff]
        %v593 = vpack.c.bf16 %v591, %v591
        %v594 = vld [vmem:[%s6] sm:$0xf]
        %v595 = vld [vmem:[%s6 + $0x4] sm:$0xf]
        %v596 = vld [vmem:[%s6 + $0x8] sm:$0xf]
        %v597 = vld [vmem:[%s6 + $0xc] sm:$0xf]
        %v602 = vunpack.c.l.b16 %v594
        %v603 = vunpack.c.l.b16 %v595
        %v604 = vunpack.c.l.b16 %v596
        %v605 = vunpack.c.l.b16 %v597
        %v606 = vpack.c.b16 %v603, %v602
        %v607 = vpack.c.b16 %v605, %v604
        %vm610 = vcmask 261120
        %v612 = vsel %vm610, %v593, 0
        %614 = vmatprep.subr.bf16.mxu0 0
        %615 = vmatpush1.bf16.msra.mxu0 %v606
        %616 = vmatprep.subr.bf16.mxu0 0
        %617 = vmatpush1.bf16.msra.mxu0 %v607
        %618 = vmatprep.subr.bf16.mxu0 0
        %619 = vmatpush1.bf16.msra.mxu0 0
        %620 = vmatprep.subr.bf16.mxu0 0
        %621 = vmatpush1.bf16.msra.mxu0 0
        %622 = vmatprep.subr.bf16.mxu0 0
        %623 = vmatpush1.bf16.msra.mxu0 0
        %624 = vmatprep.subr.bf16.mxu0 0
        %625 = vmatpush1.bf16.msra.mxu0 0
        %626 = vmatprep.subr.bf16.mxu0 0
        %627 = vmatpush1.bf16.msra.mxu0 0
        %628 = vmatprep.subr.bf16.mxu0 0
        %629 = vmatpush1.bf16.msra.mxu0 0
        %630 = vmatprep.subr.bf16.mxu0 0
        %631 = vmatpush1.bf16.msra.mxu0 0
        %632 = vmatprep.subr.bf16.mxu0 0
        %633 = vmatpush1.bf16.msra.mxu0 0
        %634 = vmatprep.subr.bf16.mxu0 0
        %635 = vmatpush1.bf16.msra.mxu0 0
        %636 = vmatprep.subr.bf16.mxu0 0
        %637 = vmatpush1.bf16.msra.mxu0 0
        %638 = vmatprep.subr.bf16.mxu0 0
        %639 = vmatpush1.bf16.msra.mxu0 0
        %640 = vmatprep.subr.bf16.mxu0 0
        %641 = vmatpush1.bf16.msra.mxu0 0
        %642 = vmatprep.subr.bf16.mxu0 0
        %643 = vmatpush1.bf16.msra.mxu0 0
        %644 = vmatprep.subr.bf16.mxu0 0
        %645 = vmatpush1.bf16.msra.mxu0 0
        %646 = vmatprep.mubr.bf16.mxu0 0
        %647 = vmatmul.mubr.bf16.gmra.mrb[0].mxu0 %v612
        %v648 = vpop.f32.mrb[0].mxu0
        %v649 = vadd.f32 0.0, %v648
        %v650 = vpop.f32.mrb[0].mxu0
        %v651 = vpop.f32.mrb[0].mxu0
        %v652 = vpop.f32.mrb[0].mxu0
        %653 = vdwg.mxu0
        %v654 = vld [vmem:[#allocation10] sm:$0xff]
        %v655 = vld [vmem:[#allocation10 + $0x8] sm:$0xff]
        %v656 = vld [vmem:[#allocation10 + $0x10] sm:$0xff]
        %v657 = vld [vmem:[#allocation10 + $0x18] sm:$0xff]
        %v658 = vld [vmem:[#allocation10 + $0x20] sm:$0xff]
        %v659 = vld [vmem:[#allocation10 + $0x28] sm:$0xff]
        %v660 = vld [vmem:[#allocation10 + $0x30] sm:$0xff]
        %v661 = vld [vmem:[#allocation10 + $0x38] sm:$0xff]
        %v662 = vld [vmem:[#allocation10 + $0x40] sm:$0xff]
        %v663 = vld [vmem:[#allocation10 + $0x48] sm:$0xff]
        %v664 = vld [vmem:[#allocation10 + $0x50] sm:$0xff]
        %v665 = vld [vmem:[#allocation10 + $0x58] sm:$0xff]
        %v666 = vld [vmem:[#allocation10 + $0x60] sm:$0xff]
        %v667 = vld [vmem:[#allocation10 + $0x68] sm:$0xff]
        %v668 = vld [vmem:[#allocation10 + $0x70] sm:$0xff]
        %v669 = vld [vmem:[#allocation10 + $0x78] sm:$0xff]
        %v671 = vcombine.high %v649, %v649
        %v673 = vunpack.c.l.s4 1966171168
        %v674 = vunpack.c.0.s8 %v673
        %v675 = vlaneseq
        %v676 = vshrl.u32 %v675, 7
        %v677 = vsub.s32 %v674, %v676
        %v678 = vrot.slane %v649, %v677
        %v680 = vunpack.c.l.s4 1966171168
        %v681 = vunpack.c.0.s8 %v680
        %v682 = vlaneseq
        %v683 = vshrl.u32 %v682, 7
        %v684 = vsub.s32 %v681, %v683
        %v685 = vrot.slane %v671, %v684
        %v686 = vcombine.high %v678, %v678
        %v687 = vcombine.high %v685, %v685
        %v689 = vunpack.c.l.s4 1966171168
        %v690 = vunpack.c.0.s8 %v689
        %v691 = vlaneseq
        %v692 = vshrl.u32 %v691, 7
        %v693 = vsub.s32 %v690, %v692
        %v694 = vrot.slane %v678, %v693
        %v696 = vunpack.c.l.s4 1966171168
        %v697 = vunpack.c.0.s8 %v696
        %v698 = vlaneseq
        %v699 = vshrl.u32 %v698, 7
        %v700 = vsub.s32 %v697, %v699
        %v701 = vrot.slane %v685, %v700
        %v703 = vunpack.c.l.s4 1966171168
        %v704 = vunpack.c.0.s8 %v703
        %v705 = vlaneseq
        %v706 = vshrl.u32 %v705, 7
        %v707 = vsub.s32 %v704, %v706
        %v708 = vrot.slane %v686, %v707
        %v710 = vunpack.c.l.s4 1966171168
        %v711 = vunpack.c.0.s8 %v710
        %v712 = vlaneseq
        %v713 = vshrl.u32 %v712, 7
        %v714 = vsub.s32 %v711, %v713
        %v715 = vrot.slane %v687, %v714
        %v716 = vcombine.high %v694, %v694
        %v717 = vcombine.high %v701, %v701
        %v718 = vcombine.high %v708, %v708
        %v719 = vcombine.high %v715, %v715
        %v720 = vlaneseq
        %v721 = vshrl.u32 %v720, 7
        %v722 = vsub.s32 0, %v721
        %v723 = vrot.slane %v694, %v722
        %v724 = vlaneseq
        %v725 = vshrl.u32 %v724, 7
        %v726 = vsub.s32 0, %v725
        %v727 = vrot.slane %v708, %v726
        %v728 = vlaneseq
        %v729 = vshrl.u32 %v728, 7
        %v730 = vsub.s32 0, %v729
        %v731 = vrot.slane %v716, %v730
        %v732 = vlaneseq
        %v733 = vshrl.u32 %v732, 7
        %v734 = vsub.s32 0, %v733
        %v735 = vrot.slane %v718, %v734
        %v736 = vlaneseq
        %v737 = vshrl.u32 %v736, 7
        %v738 = vsub.s32 0, %v737
        %v739 = vrot.slane %v701, %v738
        %v740 = vlaneseq
        %v741 = vshrl.u32 %v740, 7
        %v742 = vsub.s32 0, %v741
        %v743 = vrot.slane %v715, %v742
        %v744 = vlaneseq
        %v745 = vshrl.u32 %v744, 7
        %v746 = vsub.s32 0, %v745
        %v747 = vrot.slane %v717, %v746
        %v748 = vlaneseq
        %v749 = vshrl.u32 %v748, 7
        %v750 = vsub.s32 0, %v749
        %v751 = vrot.slane %v719, %v750
        %v760 = vadd.f32 %v654, %v723
        %v761 = vadd.f32 %v655, %v723
        %v762 = vadd.f32 %v656, %v727
        %v763 = vadd.f32 %v657, %v727
        %v764 = vadd.f32 %v658, %v731
        %v765 = vadd.f32 %v659, %v731
        %v766 = vadd.f32 %v660, %v735
        %v767 = vadd.f32 %v661, %v735
        %v768 = vadd.f32 %v662, %v739
        %v769 = vadd.f32 %v663, %v739
        %v770 = vadd.f32 %v664, %v743
        %v771 = vadd.f32 %v665, %v743
        %v772 = vadd.f32 %v666, %v747
        %v773 = vadd.f32 %v667, %v747
        %v774 = vadd.f32 %v668, %v751
        %v775 = vadd.f32 %v669, %v751
        %v776 = vmax.f32 %v760, 0.0
        %v777 = vmax.f32 %v761, 0.0
        %v778 = vmax.f32 %v762, 0.0
        %v779 = vmax.f32 %v763, 0.0
        %v780 = vmax.f32 %v764, 0.0
        %v781 = vmax.f32 %v765, 0.0
        %v782 = vmax.f32 %v766, 0.0
        %v783 = vmax.f32 %v767, 0.0
        %v784 = vmax.f32 %v768, 0.0
        %v785 = vmax.f32 %v769, 0.0
        %v786 = vmax.f32 %v770, 0.0
        %v787 = vmax.f32 %v771, 0.0
        %v788 = vmax.f32 %v772, 0.0
        %v789 = vmax.f32 %v773, 0.0
        %v790 = vmax.f32 %v774, 0.0
        %v791 = vmax.f32 %v775, 0.0
        %v792 = vld [vmem:[%s7] sm:$0x1]
        %v794 = vlaneseq
        %v795 = vshrl.u32 %v794, 7
        %v796 = vsub.s32 0, %v795
        %v797 = vrot.slane %v792, %v796
        %v799 = vmul.f32 %v776, %v797
        %v800 = vmul.f32 %v777, %v797
        %v801 = vmul.f32 %v778, %v797
        %v802 = vmul.f32 %v779, %v797
        %v803 = vmul.f32 %v780, %v797
        %v804 = vmul.f32 %v781, %v797
        %v805 = vmul.f32 %v782, %v797
        %v806 = vmul.f32 %v783, %v797
        %v807 = vmul.f32 %v784, %v797
        %v808 = vmul.f32 %v785, %v797
        %v809 = vmul.f32 %v786, %v797
        %v810 = vmul.f32 %v787, %v797
        %v811 = vmul.f32 %v788, %v797
        %v812 = vmul.f32 %v789, %v797
        %v813 = vmul.f32 %v790, %v797
        %v814 = vmul.f32 %v791, %v797
        %vm815 = vcmask 130048
        %v816 = vsel %vm815, %v799, 0.0
        %817 = vadd.xlane.f32.xlu0 %v816
        %v818 = vpop.xlane.xlu0 %817
        %v819 = vsel %vm815, %v800, 0.0
        %820 = vadd.xlane.f32.xlu0 %v819
        %v821 = vpop.xlane.xlu0 %820
        %v822 = vsel %vm815, %v801, 0.0
        %823 = vadd.xlane.f32.xlu0 %v822
        %v824 = vpop.xlane.xlu0 %823
        %v825 = vsel %vm815, %v802, 0.0
        %826 = vadd.xlane.f32.xlu0 %v825
        %v827 = vpop.xlane.xlu0 %826
        %v828 = vsel %vm815, %v803, 0.0
        %829 = vadd.xlane.f32.xlu0 %v828
        %v830 = vpop.xlane.xlu0 %829
        %v831 = vsel %vm815, %v804, 0.0
        %832 = vadd.xlane.f32.xlu0 %v831
        %v833 = vpop.xlane.xlu0 %832
        %v834 = vsel %vm815, %v805, 0.0
        %835 = vadd.xlane.f32.xlu0 %v834
        %v836 = vpop.xlane.xlu0 %835
        %v837 = vsel %vm815, %v806, 0.0
        %838 = vadd.xlane.f32.xlu0 %v837
        %v839 = vpop.xlane.xlu0 %838
        %v840 = vsel %vm815, %v807, 0.0
        %841 = vadd.xlane.f32.xlu0 %v840
        %v842 = vpop.xlane.xlu0 %841
        %v843 = vsel %vm815, %v808, 0.0
        %844 = vadd.xlane.f32.xlu0 %v843
        %v845 = vpop.xlane.xlu0 %844
        %v846 = vsel %vm815, %v809, 0.0
        %847 = vadd.xlane.f32.xlu0 %v846
        %v848 = vpop.xlane.xlu0 %847
        %v849 = vsel %vm815, %v810, 0.0
        %850 = vadd.xlane.f32.xlu0 %v849
        %v851 = vpop.xlane.xlu0 %850
        %v852 = vsel %vm815, %v811, 0.0
        %853 = vadd.xlane.f32.xlu0 %v852
        %v854 = vpop.xlane.xlu0 %853
        %v855 = vsel %vm815, %v812, 0.0
        %856 = vadd.xlane.f32.xlu0 %v855
        %v857 = vpop.xlane.xlu0 %856
        %v858 = vsel %vm815, %v813, 0.0
        %859 = vadd.xlane.f32.xlu0 %v858
        %v860 = vpop.xlane.xlu0 %859
        %v861 = vsel %vm815, %v814, 0.0
        %862 = vadd.xlane.f32.xlu0 %v861
        %v863 = vpop.xlane.xlu0 %862
        %v864 = vld [vmem:[#allocation6] sm:$0x1]
        %s865 = vtos %v864
        %v866 = vstv %s865
        %v867 = vadd.f32 %v818, %v866
        %v868 = vadd.f32 %v821, %v866
        %v869 = vadd.f32 %v824, %v866
        %v870 = vadd.f32 %v827, %v866
        %v871 = vadd.f32 %v830, %v866
        %v872 = vadd.f32 %v833, %v866
        %v873 = vadd.f32 %v836, %v866
        %v874 = vadd.f32 %v839, %v866
        %v875 = vadd.f32 %v842, %v866
        %v876 = vadd.f32 %v845, %v866
        %v877 = vadd.f32 %v848, %v866
        %v878 = vadd.f32 %v851, %v866
        %v879 = vadd.f32 %v854, %v866
        %v880 = vadd.f32 %v857, %v866
        %v881 = vadd.f32 %v860, %v866
        %v882 = vadd.f32 %v863, %v866
        %v899 = vlaneseq
        %v900 = vand.u32 %v899, 127
        %v901 = vlaneseq
        %v902 = vshrl.u32 %v901, 7
        %v903 = vsub.s32 %v900, %v902
        %v904 = vrot.slane %v867, %v903
        %v905 = vadd.s32 %v900, 4294967288
        %v906 = vlaneseq
        %v907 = vshrl.u32 %v906, 7
        %v908 = vsub.s32 %v905, %v907
        %v909 = vrot.slane %v868, %v908
        %vm910 = vcmask 130112
        %v911 = vsel %vm910, %v909, %v904
        %v912 = vlaneseq
        %v913 = vshrl.u32 %v912, 7
        %v914 = vsub.s32 %v900, %v913
        %v915 = vrot.slane %v869, %v914
        %v916 = vlaneseq
        %v917 = vshrl.u32 %v916, 7
        %v918 = vsub.s32 %v905, %v917
        %v919 = vrot.slane %v870, %v918
        %v920 = vsel %vm910, %v919, %v915
        %v921 = vlaneseq
        %v922 = vshrl.u32 %v921, 7
        %v923 = vsub.s32 %v900, %v922
        %v924 = vrot.slane %v871, %v923
        %v925 = vlaneseq
        %v926 = vshrl.u32 %v925, 7
        %v927 = vsub.s32 %v905, %v926
        %v928 = vrot.slane %v872, %v927
        %v929 = vsel %vm910, %v928, %v924
        %v930 = vlaneseq
        %v931 = vshrl.u32 %v930, 7
        %v932 = vsub.s32 %v900, %v931
        %v933 = vrot.slane %v873, %v932
        %v934 = vlaneseq
        %v935 = vshrl.u32 %v934, 7
        %v936 = vsub.s32 %v905, %v935
        %v937 = vrot.slane %v874, %v936
        %v938 = vsel %vm910, %v937, %v933
        %v939 = vlaneseq
        %v940 = vshrl.u32 %v939, 7
        %v941 = vsub.s32 %v900, %v940
        %v942 = vrot.slane %v875, %v941
        %v943 = vlaneseq
        %v944 = vshrl.u32 %v943, 7
        %v945 = vsub.s32 %v905, %v944
        %v946 = vrot.slane %v876, %v945
        %v947 = vsel %vm910, %v946, %v942
        %v948 = vlaneseq
        %v949 = vshrl.u32 %v948, 7
        %v950 = vsub.s32 %v900, %v949
        %v951 = vrot.slane %v877, %v950
        %v952 = vlaneseq
        %v953 = vshrl.u32 %v952, 7
        %v954 = vsub.s32 %v905, %v953
        %v955 = vrot.slane %v878, %v954
        %v956 = vsel %vm910, %v955, %v951
        %v957 = vlaneseq
        %v958 = vshrl.u32 %v957, 7
        %v959 = vsub.s32 %v900, %v958
        %v960 = vrot.slane %v879, %v959
        %v961 = vlaneseq
        %v962 = vshrl.u32 %v961, 7
        %v963 = vsub.s32 %v905, %v962
        %v964 = vrot.slane %v880, %v963
        %v965 = vsel %vm910, %v964, %v960
        %v966 = vlaneseq
        %v967 = vshrl.u32 %v966, 7
        %v968 = vsub.s32 %v900, %v967
        %v969 = vrot.slane %v881, %v968
        %v970 = vlaneseq
        %v971 = vshrl.u32 %v970, 7
        %v972 = vsub.s32 %v905, %v971
        %v973 = vrot.slane %v882, %v972
        %v974 = vsel %vm910, %v973, %v969
        %vm975 = vcmask 1041409
        %v976 = vsel %vm975, %v920, %v911
        %vm977 = vcmask 1042434
        %v978 = vsel %vm977, %v929, %v976
        %vm979 = vcmask 1043459
        %v980 = vsel %vm979, %v938, %v978
        %vm981 = vcmask 1044484
        %v982 = vsel %vm981, %v947, %v980
        %vm983 = vcmask 1045509
        %v984 = vsel %vm983, %v956, %v982
        %vm985 = vcmask 1046534
        %v986 = vsel %vm985, %v965, %v984
        %vm987 = vcmask 1047559
        %v988 = vsel %vm987, %v974, %v986
        %v990 = vsel %vm815, %v988, -inf
        %991 = vmax.xlane.f32.xlu0 %v990
        %v992 = vpop.xlane.xlu0 %991
        %v994 = vlaneseq
        %v995 = vshrl.u32 %v994, 7
        %v996 = vsub.s32 0, %v995
        %v997 = vrot.slane %v992, %v996
        %v998 = vlaneseq
        %v999 = vshrl.u32 %v998, 7
        %v1000 = vsub.s32 1, %v999
        %v1001 = vrot.slane %v992, %v1000
        %v1002 = vlaneseq
        %v1003 = vshrl.u32 %v1002, 7
        %v1004 = vsub.s32 2, %v1003
        %v1005 = vrot.slane %v992, %v1004
        %v1006 = vlaneseq
        %v1007 = vshrl.u32 %v1006, 7
        %v1008 = vsub.s32 3, %v1007
        %v1009 = vrot.slane %v992, %v1008
        %v1010 = vlaneseq
        %v1011 = vshrl.u32 %v1010, 7
        %v1012 = vsub.s32 4, %v1011
        %v1013 = vrot.slane %v992, %v1012
        %v1014 = vlaneseq
        %v1015 = vshrl.u32 %v1014, 7
        %v1016 = vsub.s32 5, %v1015
        %v1017 = vrot.slane %v992, %v1016
        %v1018 = vlaneseq
        %v1019 = vshrl.u32 %v1018, 7
        %v1020 = vsub.s32 6, %v1019
        %v1021 = vrot.slane %v992, %v1020
        %v1022 = vlaneseq
        %v1023 = vshrl.u32 %v1022, 7
        %v1024 = vsub.s32 7, %v1023
        %v1025 = vrot.slane %v992, %v1024
        %v1034 = vsub.f32 %v867, %v997
        %v1035 = vsub.f32 %v868, %v997
        %v1036 = vsub.f32 %v869, %v1001
        %v1037 = vsub.f32 %v870, %v1001
        %v1038 = vsub.f32 %v871, %v1005
        %v1039 = vsub.f32 %v872, %v1005
        %v1040 = vsub.f32 %v873, %v1009
        %v1041 = vsub.f32 %v874, %v1009
        %v1042 = vsub.f32 %v875, %v1013
        %v1043 = vsub.f32 %v876, %v1013
        %v1044 = vsub.f32 %v877, %v1017
        %v1045 = vsub.f32 %v878, %v1017
        %v1046 = vsub.f32 %v879, %v1021
        %v1047 = vsub.f32 %v880, %v1021
        %v1048 = vsub.f32 %v881, %v1025
        %v1049 = vsub.f32 %v882, %v1025
        %v1050 = vmul.f32 %v1034, 1.442695
        %v1051 = vpow.pop %v1050
        %v1052 = vmul.f32 %v1035, 1.442695
        %v1053 = vpow.pop %v1052
        %v1054 = vmul.f32 %v1036, 1.442695
        %v1055 = vpow.pop %v1054
        %v1056 = vmul.f32 %v1037, 1.442695
        %v1057 = vpow.pop %v1056
        %v1058 = vmul.f32 %v1038, 1.442695
        %v1059 = vpow.pop %v1058
        %v1060 = vmul.f32 %v1039, 1.442695
        %v1061 = vpow.pop %v1060
        %v1062 = vmul.f32 %v1040, 1.442695
        %v1063 = vpow.pop %v1062
        %v1064 = vmul.f32 %v1041, 1.442695
        %v1065 = vpow.pop %v1064
        %v1066 = vmul.f32 %v1042, 1.442695
        %v1067 = vpow.pop %v1066
        %v1068 = vmul.f32 %v1043, 1.442695
        %v1069 = vpow.pop %v1068
        %v1070 = vmul.f32 %v1044, 1.442695
        %v1071 = vpow.pop %v1070
        %v1072 = vmul.f32 %v1045, 1.442695
        %v1073 = vpow.pop %v1072
        %v1074 = vmul.f32 %v1046, 1.442695
        %v1075 = vpow.pop %v1074
        %v1076 = vmul.f32 %v1047, 1.442695
        %v1077 = vpow.pop %v1076
        %v1078 = vmul.f32 %v1048, 1.442695
        %v1079 = vpow.pop %v1078
        %v1080 = vmul.f32 %v1049, 1.442695
        %v1081 = vpow.pop %v1080
        %1098 = vset.pattern.permute.xlu0 0
        %1099 = vperm.xlu0 %1098, %v1051
        %v1100 = vpop.permute.xlu0 %1099
        %1101 = vset.pattern.permute.xlu0 0
        %1102 = vperm.xlu0 %1101, %v1053
        %v1103 = vpop.permute.xlu0 %1102
        %1104 = vset.pattern.permute.xlu0 0
        %1105 = vperm.xlu0 %1104, %v1055
        %v1106 = vpop.permute.xlu0 %1105
        %1107 = vset.pattern.permute.xlu0 0
        %1108 = vperm.xlu0 %1107, %v1057
        %v1109 = vpop.permute.xlu0 %1108
        %1110 = vset.pattern.permute.xlu0 0
        %1111 = vperm.xlu0 %1110, %v1059
        %v1112 = vpop.permute.xlu0 %1111
        %1113 = vset.pattern.permute.xlu0 0
        %1114 = vperm.xlu0 %1113, %v1061
        %v1115 = vpop.permute.xlu0 %1114
        %1116 = vset.pattern.permute.xlu0 0
        %1117 = vperm.xlu0 %1116, %v1063
        %v1118 = vpop.permute.xlu0 %1117
        %1119 = vset.pattern.permute.xlu0 0
        %1120 = vperm.xlu0 %1119, %v1065
        %v1121 = vpop.permute.xlu0 %1120
        %1122 = vset.pattern.permute.xlu0 0
        %1123 = vperm.xlu0 %1122, %v1067
        %v1124 = vpop.permute.xlu0 %1123
        %1125 = vset.pattern.permute.xlu0 0
        %1126 = vperm.xlu0 %1125, %v1069
        %v1127 = vpop.permute.xlu0 %1126
        %1128 = vset.pattern.permute.xlu0 0
        %1129 = vperm.xlu0 %1128, %v1071
        %v1130 = vpop.permute.xlu0 %1129
        %1131 = vset.pattern.permute.xlu0 0
        %1132 = vperm.xlu0 %1131, %v1073
        %v1133 = vpop.permute.xlu0 %1132
        %1134 = vset.pattern.permute.xlu0 0
        %1135 = vperm.xlu0 %1134, %v1075
        %v1136 = vpop.permute.xlu0 %1135
        %1137 = vset.pattern.permute.xlu0 0
        %1138 = vperm.xlu0 %1137, %v1077
        %v1139 = vpop.permute.xlu0 %1138
        %1140 = vset.pattern.permute.xlu0 0
        %1141 = vperm.xlu0 %1140, %v1079
        %v1142 = vpop.permute.xlu0 %1141
        %1143 = vset.pattern.permute.xlu0 0
        %1144 = vperm.xlu0 %1143, %v1081
        %v1145 = vpop.permute.xlu0 %1144
        %v1146 = vlaneseq
        %v1147 = vshrl.u32 %v1146, 7
        %v1148 = vsub.s32 %v900, %v1147
        %v1149 = vrot.slane %v1100, %v1148
        %v1150 = vlaneseq
        %v1151 = vshrl.u32 %v1150, 7
        %v1152 = vsub.s32 %v905, %v1151
        %v1153 = vrot.slane %v1103, %v1152
        %v1154 = vsel %vm910, %v1153, %v1149
        %v1155 = vlaneseq
        %v1156 = vshrl.u32 %v1155, 7
        %v1157 = vsub.s32 %v900, %v1156
        %v1158 = vrot.slane %v1106, %v1157
        %v1159 = vlaneseq
        %v1160 = vshrl.u32 %v1159, 7
        %v1161 = vsub.s32 %v905, %v1160
        %v1162 = vrot.slane %v1109, %v1161
        %v1163 = vsel %vm910, %v1162, %v1158
        %v1164 = vlaneseq
        %v1165 = vshrl.u32 %v1164, 7
        %v1166 = vsub.s32 %v900, %v1165
        %v1167 = vrot.slane %v1112, %v1166
        %v1168 = vlaneseq
        %v1169 = vshrl.u32 %v1168, 7
        %v1170 = vsub.s32 %v905, %v1169
        %v1171 = vrot.slane %v1115, %v1170
        %v1172 = vsel %vm910, %v1171, %v1167
        %v1173 = vlaneseq
        %v1174 = vshrl.u32 %v1173, 7
        %v1175 = vsub.s32 %v900, %v1174
        %v1176 = vrot.slane %v1118, %v1175
        %v1177 = vlaneseq
        %v1178 = vshrl.u32 %v1177, 7
        %v1179 = vsub.s32 %v905, %v1178
        %v1180 = vrot.slane %v1121, %v1179
        %v1181 = vsel %vm910, %v1180, %v1176
        %v1182 = vlaneseq
        %v1183 = vshrl.u32 %v1182, 7
        %v1184 = vsub.s32 %v900, %v1183
        %v1185 = vrot.slane %v1124, %v1184
        %v1186 = vlaneseq
        %v1187 = vshrl.u32 %v1186, 7
        %v1188 = vsub.s32 %v905, %v1187
        %v1189 = vrot.slane %v1127, %v1188
        %v1190 = vsel %vm910, %v1189, %v1185
        %v1191 = vlaneseq
        %v1192 = vshrl.u32 %v1191, 7
        %v1193 = vsub.s32 %v900, %v1192
        %v1194 = vrot.slane %v1130, %v1193
        %v1195 = vlaneseq
        %v1196 = vshrl.u32 %v1195, 7
        %v1197 = vsub.s32 %v905, %v1196
        %v1198 = vrot.slane %v1133, %v1197
        %v1199 = vsel %vm910, %v1198, %v1194
        %v1200 = vlaneseq
        %v1201 = vshrl.u32 %v1200, 7
        %v1202 = vsub.s32 %v900, %v1201
        %v1203 = vrot.slane %v1136, %v1202
        %v1204 = vlaneseq
        %v1205 = vshrl.u32 %v1204, 7
        %v1206 = vsub.s32 %v905, %v1205
        %v1207 = vrot.slane %v1139, %v1206
        %v1208 = vsel %vm910, %v1207, %v1203
        %v1209 = vlaneseq
        %v1210 = vshrl.u32 %v1209, 7
        %v1211 = vsub.s32 %v900, %v1210
        %v1212 = vrot.slane %v1142, %v1211
        %v1213 = vlaneseq
        %v1214 = vshrl.u32 %v1213, 7
        %v1215 = vsub.s32 %v905, %v1214
        %v1216 = vrot.slane %v1145, %v1215
        %v1217 = vsel %vm910, %v1216, %v1212
        %v1218 = vsel %vm975, %v1163, %v1154
        %v1219 = vsel %vm977, %v1172, %v1218
        %v1220 = vsel %vm979, %v1181, %v1219
        %v1221 = vsel %vm981, %v1190, %v1220
        %v1222 = vsel %vm983, %v1199, %v1221
        %v1223 = vsel %vm985, %v1208, %v1222
        %v1224 = vsel %vm987, %v1217, %v1223
        %v1226 = vsel %vm815, %v1224, 0.0
        %1227 = vadd.xlane.f32.xlu0 %v1226
        %v1228 = vpop.xlane.xlu0 %1227
        %v1229 = vrcp.pop %v1228
        %v1231 = vlaneseq
        %v1232 = vshrl.u32 %v1231, 7
        %v1233 = vsub.s32 0, %v1232
        %v1234 = vrot.slane %v1229, %v1233
        %v1235 = vlaneseq
        %v1236 = vshrl.u32 %v1235, 7
        %v1237 = vsub.s32 1, %v1236
        %v1238 = vrot.slane %v1229, %v1237
        %v1239 = vlaneseq
        %v1240 = vshrl.u32 %v1239, 7
        %v1241 = vsub.s32 2, %v1240
        %v1242 = vrot.slane %v1229, %v1241
        %v1243 = vlaneseq
        %v1244 = vshrl.u32 %v1243, 7
        %v1245 = vsub.s32 3, %v1244
        %v1246 = vrot.slane %v1229, %v1245
        %v1247 = vlaneseq
        %v1248 = vshrl.u32 %v1247, 7
        %v1249 = vsub.s32 4, %v1248
        %v1250 = vrot.slane %v1229, %v1249
        %v1251 = vlaneseq
        %v1252 = vshrl.u32 %v1251, 7
        %v1253 = vsub.s32 5, %v1252
        %v1254 = vrot.slane %v1229, %v1253
        %v1255 = vlaneseq
        %v1256 = vshrl.u32 %v1255, 7
        %v1257 = vsub.s32 6, %v1256
        %v1258 = vrot.slane %v1229, %v1257
        %v1259 = vlaneseq
        %v1260 = vshrl.u32 %v1259, 7
        %v1261 = vsub.s32 7, %v1260
        %v1262 = vrot.slane %v1229, %v1261
        %v1271 = vmul.f32 %v1051, %v1234
        %v1272 = vmul.f32 %v1053, %v1234
        %v1273 = vmul.f32 %v1055, %v1238
        %v1274 = vmul.f32 %v1057, %v1238
        %v1275 = vmul.f32 %v1059, %v1242
        %v1276 = vmul.f32 %v1061, %v1242
        %v1277 = vmul.f32 %v1063, %v1246
        %v1278 = vmul.f32 %v1065, %v1246
        %v1279 = vmul.f32 %v1067, %v1250
        %v1280 = vmul.f32 %v1069, %v1250
        %v1281 = vmul.f32 %v1071, %v1254
        %v1282 = vmul.f32 %v1073, %v1254
        %v1283 = vmul.f32 %v1075, %v1258
        %v1284 = vmul.f32 %v1077, %v1258
        %v1285 = vmul.f32 %v1079, %v1262
        %v1286 = vmul.f32 %v1081, %v1262
        %v1287 = vpack.c.bf16 %v1272, %v1271
        %v1288 = vpack.c.bf16 %v1274, %v1273
        %v1289 = vpack.c.bf16 %v1276, %v1275
        %v1290 = vpack.c.bf16 %v1278, %v1277
        %v1291 = vpack.c.bf16 %v1280, %v1279
        %v1292 = vpack.c.bf16 %v1282, %v1281
        %v1293 = vpack.c.bf16 %v1284, %v1283
        %v1294 = vpack.c.bf16 %v1286, %v1285
        %v1295 = vld [vmem:[#allocation7] sm:$0xf]
        %v1296 = vld [vmem:[#allocation7 + $0x4] sm:$0xf]
        %v1297 = vld [vmem:[#allocation7 + $0x8] sm:$0xf]
        %v1298 = vld [vmem:[#allocation7 + $0xc] sm:$0xf]
        %v1299 = vld [vmem:[#allocation7 + $0x10] sm:$0xf]
        %v1300 = vld [vmem:[#allocation7 + $0x14] sm:$0xf]
        %v1301 = vld [vmem:[#allocation7 + $0x18] sm:$0xf]
        %v1302 = vld [vmem:[#allocation7 + $0x1c] sm:$0xf]
        %v1303 = vld [vmem:[#allocation7 + $0x20] sm:$0xf]
        %v1304 = vld [vmem:[#allocation7 + $0x24] sm:$0xf]
        %v1305 = vld [vmem:[#allocation7 + $0x28] sm:$0xf]
        %v1306 = vld [vmem:[#allocation7 + $0x2c] sm:$0xf]
        %v1307 = vld [vmem:[#allocation7 + $0x30] sm:$0xf]
        %v1308 = vld [vmem:[#allocation7 + $0x34] sm:$0xf]
        %v1309 = vld [vmem:[#allocation7 + $0x38] sm:$0xf]
        %v1310 = vld [vmem:[#allocation7 + $0x3c] sm:$0xf]
        %v1312 = vunpack.c.l.b16 %v1287
        %v1313 = vunpack.c.h.b16 %v1287
        %1314 = vset.pattern.permute.xlu0 0
        %1315 = vperm.xlu0 %1314, %v1312
        %v1316 = vpop.permute.xlu0 %1315
        %1317 = vset.pattern.permute.xlu0 0
        %1318 = vperm.xlu0 %1317, %v1313
        %v1319 = vpop.permute.xlu0 %1318
        %v1320 = vlaneseq
        %v1321 = vshrl.u32 %v1320, 7
        %v1322 = vsub.s32 %v900, %v1321
        %v1323 = vrot.slane %v1316, %v1322
        %v1324 = vlaneseq
        %v1325 = vshrl.u32 %v1324, 7
        %v1326 = vsub.s32 %v905, %v1325
        %v1327 = vrot.slane %v1319, %v1326
        %v1328 = vsel %vm910, %v1327, %v1323
        %v1329 = vpack.c.b16 %v1328, %v1328
        %v1332 = vunpack.c.l.b16 %v1295
        %v1333 = vunpack.c.l.b16 %v1296
        %v1334 = vpack.c.b16 %v1333, %v1332
        %v1337 = vsel %vm815, %v1329, 0
        %1339 = vmatprep.subr.bf16.mxu0 0
        %1340 = vmatpush1.bf16.msra.mxu0 %v1334
        %1341 = vmatprep.subr.bf16.mxu0 0
        %1342 = vmatpush1.bf16.msra.mxu0 0
        %1343 = vmatprep.subr.bf16.mxu0 0
        %1344 = vmatpush1.bf16.msra.mxu0 0
        %1345 = vmatprep.subr.bf16.mxu0 0
        %1346 = vmatpush1.bf16.msra.mxu0 0
        %1347 = vmatprep.subr.bf16.mxu0 0
        %1348 = vmatpush1.bf16.msra.mxu0 0
        %1349 = vmatprep.subr.bf16.mxu0 0
        %1350 = vmatpush1.bf16.msra.mxu0 0
        %1351 = vmatprep.subr.bf16.mxu0 0
        %1352 = vmatpush1.bf16.msra.mxu0 0
        %1353 = vmatprep.subr.bf16.mxu0 0
        %1354 = vmatpush1.bf16.msra.mxu0 0
        %1355 = vmatprep.subr.bf16.mxu0 0
        %1356 = vmatpush1.bf16.msra.mxu0 0
        %1357 = vmatprep.subr.bf16.mxu0 0
        %1358 = vmatpush1.bf16.msra.mxu0 0
        %1359 = vmatprep.subr.bf16.mxu0 0
        %1360 = vmatpush1.bf16.msra.mxu0 0
        %1361 = vmatprep.subr.bf16.mxu0 0
        %1362 = vmatpush1.bf16.msra.mxu0 0
        %1363 = vmatprep.subr.bf16.mxu0 0
        %1364 = vmatpush1.bf16.msra.mxu0 0
        %1365 = vmatprep.subr.bf16.mxu0 0
        %1366 = vmatpush1.bf16.msra.mxu0 0
        %1367 = vmatprep.subr.bf16.mxu0 0
        %1368 = vmatpush1.bf16.msra.mxu0 0
        %1369 = vmatprep.subr.bf16.mxu0 0
        %1370 = vmatpush1.bf16.msra.mxu0 0
        %1371 = vmatprep.mubr.bf16.mxu0 0
        %1372 = vmatmul.mubr.bf16.gmra.mrb[0].mxu0 %v1337
        %v1373 = vpop.f32.mrb[0].mxu0
        %v1374 = vadd.f32 0.0, %v1373
        %v1375 = vpop.f32.mrb[0].mxu0
        %v1376 = vpop.f32.mrb[0].mxu0
        %v1377 = vpop.f32.mrb[0].mxu0
        %1378 = vdwg.mxu0
        %v1380 = vunpack.c.l.b16 %v1288
        %v1381 = vunpack.c.h.b16 %v1288
        %1382 = vset.pattern.permute.xlu0 0
        %1383 = vperm.xlu0 %1382, %v1380
        %v1384 = vpop.permute.xlu0 %1383
        %1385 = vset.pattern.permute.xlu0 0
        %1386 = vperm.xlu0 %1385, %v1381
        %v1387 = vpop.permute.xlu0 %1386
        %v1388 = vlaneseq
        %v1389 = vshrl.u32 %v1388, 7
        %v1390 = vsub.s32 %v900, %v1389
        %v1391 = vrot.slane %v1384, %v1390
        %v1392 = vlaneseq
        %v1393 = vshrl.u32 %v1392, 7
        %v1394 = vsub.s32 %v905, %v1393
        %v1395 = vrot.slane %v1387, %v1394
        %v1396 = vsel %vm910, %v1395, %v1391
        %v1397 = vpack.c.b16 %v1396, %v1396
        %v1400 = vunpack.c.l.b16 %v1297
        %v1401 = vunpack.c.l.b16 %v1298
        %v1402 = vpack.c.b16 %v1401, %v1400
        %v1405 = vsel %vm815, %v1397, 0
        %1407 = vmatprep.subr.bf16.mxu0 0
        %1408 = vmatpush1.bf16.msra.mxu0 %v1402
        %1409 = vmatprep.subr.bf16.mxu0 0
        %1410 = vmatpush1.bf16.msra.mxu0 0
        %1411 = vmatprep.subr.bf16.mxu0 0
        %1412 = vmatpush1.bf16.msra.mxu0 0
        %1413 = vmatprep.subr.bf16.mxu0 0
        %1414 = vmatpush1.bf16.msra.mxu0 0
        %1415 = vmatprep.subr.bf16.mxu0 0
        %1416 = vmatpush1.bf16.msra.mxu0 0
        %1417 = vmatprep.subr.bf16.mxu0 0
        %1418 = vmatpush1.bf16.msra.mxu0 0
        %1419 = vmatprep.subr.bf16.mxu0 0
        %1420 = vmatpush1.bf16.msra.mxu0 0
        %1421 = vmatprep.subr.bf16.mxu0 0
        %1422 = vmatpush1.bf16.msra.mxu0 0
        %1423 = vmatprep.subr.bf16.mxu0 0
        %1424 = vmatpush1.bf16.msra.mxu0 0
        %1425 = vmatprep.subr.bf16.mxu0 0
        %1426 = vmatpush1.bf16.msra.mxu0 0
        %1427 = vmatprep.subr.bf16.mxu0 0
        %1428 = vmatpush1.bf16.msra.mxu0 0
        %1429 = vmatprep.subr.bf16.mxu0 0
        %1430 = vmatpush1.bf16.msra.mxu0 0
        %1431 = vmatprep.subr.bf16.mxu0 0
        %1432 = vmatpush1.bf16.msra.mxu0 0
        %1433 = vmatprep.subr.bf16.mxu0 0
        %1434 = vmatpush1.bf16.msra.mxu0 0
        %1435 = vmatprep.subr.bf16.mxu0 0
        %1436 = vmatpush1.bf16.msra.mxu0 0
        %1437 = vmatprep.subr.bf16.mxu0 0
        %1438 = vmatpush1.bf16.msra.mxu0 0
        %1439 = vmatprep.mubr.bf16.mxu0 0
        %1440 = vmatmul.mubr.bf16.gmra.mrb[0].mxu0 %v1405
        %v1441 = vpop.f32.mrb[0].mxu0
        %v1442 = vadd.f32 0.0, %v1441
        %v1443 = vpop.f32.mrb[0].mxu0
        %v1444 = vpop.f32.mrb[0].mxu0
        %v1445 = vpop.f32.mrb[0].mxu0
        %1446 = vdwg.mxu0
        %v1448 = vunpack.c.l.b16 %v1289
        %v1449 = vunpack.c.h.b16 %v1289
        %1450 = vset.pattern.permute.xlu0 0
        %1451 = vperm.xlu0 %1450, %v1448
        %v1452 = vpop.permute.xlu0 %1451
        %1453 = vset.pattern.permute.xlu0 0
        %1454 = vperm.xlu0 %1453, %v1449
        %v1455 = vpop.permute.xlu0 %1454
        %v1456 = vlaneseq
        %v1457 = vshrl.u32 %v1456, 7
        %v1458 = vsub.s32 %v900, %v1457
        %v1459 = vrot.slane %v1452, %v1458
        %v1460 = vlaneseq
        %v1461 = vshrl.u32 %v1460, 7
        %v1462 = vsub.s32 %v905, %v1461
        %v1463 = vrot.slane %v1455, %v1462
        %v1464 = vsel %vm910, %v1463, %v1459
        %v1465 = vpack.c.b16 %v1464, %v1464
        %v1468 = vunpack.c.l.b16 %v1299
        %v1469 = vunpack.c.l.b16 %v1300
        %v1470 = vpack.c.b16 %v1469, %v1468
        %v1473 = vsel %vm815, %v1465, 0
        %1475 = vmatprep.subr.bf16.mxu0 0
        %1476 = vmatpush1.bf16.msra.mxu0 %v1470
        %1477 = vmatprep.subr.bf16.mxu0 0
        %1478 = vmatpush1.bf16.msra.mxu0 0
        %1479 = vmatprep.subr.bf16.mxu0 0
        %1480 = vmatpush1.bf16.msra.mxu0 0
        %1481 = vmatprep.subr.bf16.mxu0 0
        %1482 = vmatpush1.bf16.msra.mxu0 0
        %1483 = vmatprep.subr.bf16.mxu0 0
        %1484 = vmatpush1.bf16.msra.mxu0 0
        %1485 = vmatprep.subr.bf16.mxu0 0
        %1486 = vmatpush1.bf16.msra.mxu0 0
        %1487 = vmatprep.subr.bf16.mxu0 0
        %1488 = vmatpush1.bf16.msra.mxu0 0
        %1489 = vmatprep.subr.bf16.mxu0 0
        %1490 = vmatpush1.bf16.msra.mxu0 0
        %1491 = vmatprep.subr.bf16.mxu0 0
        %1492 = vmatpush1.bf16.msra.mxu0 0
        %1493 = vmatprep.subr.bf16.mxu0 0
        %1494 = vmatpush1.bf16.msra.mxu0 0
        %1495 = vmatprep.subr.bf16.mxu0 0
        %1496 = vmatpush1.bf16.msra.mxu0 0
        %1497 = vmatprep.subr.bf16.mxu0 0
        %1498 = vmatpush1.bf16.msra.mxu0 0
        %1499 = vmatprep.subr.bf16.mxu0 0
        %1500 = vmatpush1.bf16.msra.mxu0 0
        %1501 = vmatprep.subr.bf16.mxu0 0
        %1502 = vmatpush1.bf16.msra.mxu0 0
        %1503 = vmatprep.subr.bf16.mxu0 0
        %1504 = vmatpush1.bf16.msra.mxu0 0
        %1505 = vmatprep.subr.bf16.mxu0 0
        %1506 = vmatpush1.bf16.msra.mxu0 0
        %1507 = vmatprep.mubr.bf16.mxu0 0
        %1508 = vmatmul.mubr.bf16.gmra.mrb[0].mxu0 %v1473
        %v1509 = vpop.f32.mrb[0].mxu0
        %v1510 = vadd.f32 0.0, %v1509
        %v1511 = vpop.f32.mrb[0].mxu0
        %v1512 = vpop.f32.mrb[0].mxu0
        %v1513 = vpop.f32.mrb[0].mxu0
        %1514 = vdwg.mxu0
        %v1516 = vunpack.c.l.b16 %v1290
        %v1517 = vunpack.c.h.b16 %v1290
        %1518 = vset.pattern.permute.xlu0 0
        %1519 = vperm.xlu0 %1518, %v1516
        %v1520 = vpop.permute.xlu0 %1519
        %1521 = vset.pattern.permute.xlu0 0
        %1522 = vperm.xlu0 %1521, %v1517
        %v1523 = vpop.permute.xlu0 %1522
        %v1524 = vlaneseq
        %v1525 = vshrl.u32 %v1524, 7
        %v1526 = vsub.s32 %v900, %v1525
        %v1527 = vrot.slane %v1520, %v1526
        %v1528 = vlaneseq
        %v1529 = vshrl.u32 %v1528, 7
        %v1530 = vsub.s32 %v905, %v1529
        %v1531 = vrot.slane %v1523, %v1530
        %v1532 = vsel %vm910, %v1531, %v1527
        %v1533 = vpack.c.b16 %v1532, %v1532
        %v1536 = vunpack.c.l.b16 %v1301
        %v1537 = vunpack.c.l.b16 %v1302
        %v1538 = vpack.c.b16 %v1537, %v1536
        %v1541 = vsel %vm815, %v1533, 0
        %1543 = vmatprep.subr.bf16.mxu0 0
        %1544 = vmatpush1.bf16.msra.mxu0 %v1538
        %1545 = vmatprep.subr.bf16.mxu0 0
        %1546 = vmatpush1.bf16.msra.mxu0 0
        %1547 = vmatprep.subr.bf16.mxu0 0
        %1548 = vmatpush1.bf16.msra.mxu0 0
        %1549 = vmatprep.subr.bf16.mxu0 0
        %1550 = vmatpush1.bf16.msra.mxu0 0
        %1551 = vmatprep.subr.bf16.mxu0 0
        %1552 = vmatpush1.bf16.msra.mxu0 0
        %1553 = vmatprep.subr.bf16.mxu0 0
        %1554 = vmatpush1.bf16.msra.mxu0 0
        %1555 = vmatprep.subr.bf16.mxu0 0
        %1556 = vmatpush1.bf16.msra.mxu0 0
        %1557 = vmatprep.subr.bf16.mxu0 0
        %1558 = vmatpush1.bf16.msra.mxu0 0
        %1559 = vmatprep.subr.bf16.mxu0 0
        %1560 = vmatpush1.bf16.msra.mxu0 0
        %1561 = vmatprep.subr.bf16.mxu0 0
        %1562 = vmatpush1.bf16.msra.mxu0 0
        %1563 = vmatprep.subr.bf16.mxu0 0
        %1564 = vmatpush1.bf16.msra.mxu0 0
        %1565 = vmatprep.subr.bf16.mxu0 0
        %1566 = vmatpush1.bf16.msra.mxu0 0
        %1567 = vmatprep.subr.bf16.mxu0 0
        %1568 = vmatpush1.bf16.msra.mxu0 0
        %1569 = vmatprep.subr.bf16.mxu0 0
        %1570 = vmatpush1.bf16.msra.mxu0 0
        %1571 = vmatprep.subr.bf16.mxu0 0
        %1572 = vmatpush1.bf16.msra.mxu0 0
        %1573 = vmatprep.subr.bf16.mxu0 0
        %1574 = vmatpush1.bf16.msra.mxu0 0
        %1575 = vmatprep.mubr.bf16.mxu0 0
        %1576 = vmatmul.mubr.bf16.gmra.mrb[0].mxu0 %v1541
        %v1577 = vpop.f32.mrb[0].mxu0
        %v1578 = vadd.f32 0.0, %v1577
        %v1579 = vpop.f32.mrb[0].mxu0
        %v1580 = vpop.f32.mrb[0].mxu0
        %v1581 = vpop.f32.mrb[0].mxu0
        %1582 = vdwg.mxu0
        %v1584 = vunpack.c.l.b16 %v1291
        %v1585 = vunpack.c.h.b16 %v1291
        %1586 = vset.pattern.permute.xlu0 0
        %1587 = vperm.xlu0 %1586, %v1584
        %v1588 = vpop.permute.xlu0 %1587
        %1589 = vset.pattern.permute.xlu0 0
        %1590 = vperm.xlu0 %1589, %v1585
        %v1591 = vpop.permute.xlu0 %1590
        %v1592 = vlaneseq
        %v1593 = vshrl.u32 %v1592, 7
        %v1594 = vsub.s32 %v900, %v1593
        %v1595 = vrot.slane %v1588, %v1594
        %v1596 = vlaneseq
        %v1597 = vshrl.u32 %v1596, 7
        %v1598 = vsub.s32 %v905, %v1597
        %v1599 = vrot.slane %v1591, %v1598
        %v1600 = vsel %vm910, %v1599, %v1595
        %v1601 = vpack.c.b16 %v1600, %v1600
        %v1604 = vunpack.c.l.b16 %v1303
        %v1605 = vunpack.c.l.b16 %v1304
        %v1606 = vpack.c.b16 %v1605, %v1604
        %v1609 = vsel %vm815, %v1601, 0
        %1611 = vmatprep.subr.bf16.mxu0 0
        %1612 = vmatpush1.bf16.msra.mxu0 %v1606
        %1613 = vmatprep.subr.bf16.mxu0 0
        %1614 = vmatpush1.bf16.msra.mxu0 0
        %1615 = vmatprep.subr.bf16.mxu0 0
        %1616 = vmatpush1.bf16.msra.mxu0 0
        %1617 = vmatprep.subr.bf16.mxu0 0
        %1618 = vmatpush1.bf16.msra.mxu0 0
        %1619 = vmatprep.subr.bf16.mxu0 0
        %1620 = vmatpush1.bf16.msra.mxu0 0
        %1621 = vmatprep.subr.bf16.mxu0 0
        %1622 = vmatpush1.bf16.msra.mxu0 0
        %1623 = vmatprep.subr.bf16.mxu0 0
        %1624 = vmatpush1.bf16.msra.mxu0 0
        %1625 = vmatprep.subr.bf16.mxu0 0
        %1626 = vmatpush1.bf16.msra.mxu0 0
        %1627 = vmatprep.subr.bf16.mxu0 0
        %1628 = vmatpush1.bf16.msra.mxu0 0
        %1629 = vmatprep.subr.bf16.mxu0 0
        %1630 = vmatpush1.bf16.msra.mxu0 0
        %1631 = vmatprep.subr.bf16.mxu0 0
        %1632 = vmatpush1.bf16.msra.mxu0 0
        %1633 = vmatprep.subr.bf16.mxu0 0
        %1634 = vmatpush1.bf16.msra.mxu0 0
        %1635 = vmatprep.subr.bf16.mxu0 0
        %1636 = vmatpush1.bf16.msra.mxu0 0
        %1637 = vmatprep.subr.bf16.mxu0 0
        %1638 = vmatpush1.bf16.msra.mxu0 0
        %1639 = vmatprep.subr.bf16.mxu0 0
        %1640 = vmatpush1.bf16.msra.mxu0 0
        %1641 = vmatprep.subr.bf16.mxu0 0
        %1642 = vmatpush1.bf16.msra.mxu0 0
        %1643 = vmatprep.mubr.bf16.mxu0 0
        %1644 = vmatmul.mubr.bf16.gmra.mrb[0].mxu0 %v1609
        %v1645 = vpop.f32.mrb[0].mxu0
        %v1646 = vadd.f32 0.0, %v1645
        %v1647 = vpop.f32.mrb[0].mxu0
        %v1648 = vpop.f32.mrb[0].mxu0
        %v1649 = vpop.f32.mrb[0].mxu0
        %1650 = vdwg.mxu0
        %v1652 = vunpack.c.l.b16 %v1292
        %v1653 = vunpack.c.h.b16 %v1292
        %1654 = vset.pattern.permute.xlu0 0
        %1655 = vperm.xlu0 %1654, %v1652
        %v1656 = vpop.permute.xlu0 %1655
        %1657 = vset.pattern.permute.xlu0 0
        %1658 = vperm.xlu0 %1657, %v1653
        %v1659 = vpop.permute.xlu0 %1658
        %v1660 = vlaneseq
        %v1661 = vshrl.u32 %v1660, 7
        %v1662 = vsub.s32 %v900, %v1661
        %v1663 = vrot.slane %v1656, %v1662
        %v1664 = vlaneseq
        %v1665 = vshrl.u32 %v1664, 7
        %v1666 = vsub.s32 %v905, %v1665
        %v1667 = vrot.slane %v1659, %v1666
        %v1668 = vsel %vm910, %v1667, %v1663
        %v1669 = vpack.c.b16 %v1668, %v1668
        %v1672 = vunpack.c.l.b16 %v1305
        %v1673 = vunpack.c.l.b16 %v1306
        %v1674 = vpack.c.b16 %v1673, %v1672
        %v1677 = vsel %vm815, %v1669, 0
        %1679 = vmatprep.subr.bf16.mxu0 0
        %1680 = vmatpush1.bf16.msra.mxu0 %v1674
        %1681 = vmatprep.subr.bf16.mxu0 0
        %1682 = vmatpush1.bf16.msra.mxu0 0
        %1683 = vmatprep.subr.bf16.mxu0 0
        %1684 = vmatpush1.bf16.msra.mxu0 0
        %1685 = vmatprep.subr.bf16.mxu0 0
        %1686 = vmatpush1.bf16.msra.mxu0 0
        %1687 = vmatprep.subr.bf16.mxu0 0
        %1688 = vmatpush1.bf16.msra.mxu0 0
        %1689 = vmatprep.subr.bf16.mxu0 0
        %1690 = vmatpush1.bf16.msra.mxu0 0
        %1691 = vmatprep.subr.bf16.mxu0 0
        %1692 = vmatpush1.bf16.msra.mxu0 0
        %1693 = vmatprep.subr.bf16.mxu0 0
        %1694 = vmatpush1.bf16.msra.mxu0 0
        %1695 = vmatprep.subr.bf16.mxu0 0
        %1696 = vmatpush1.bf16.msra.mxu0 0
        %1697 = vmatprep.subr.bf16.mxu0 0
        %1698 = vmatpush1.bf16.msra.mxu0 0
        %1699 = vmatprep.subr.bf16.mxu0 0
        %1700 = vmatpush1.bf16.msra.mxu0 0
        %1701 = vmatprep.subr.bf16.mxu0 0
        %1702 = vmatpush1.bf16.msra.mxu0 0
        %1703 = vmatprep.subr.bf16.mxu0 0
        %1704 = vmatpush1.bf16.msra.mxu0 0
        %1705 = vmatprep.subr.bf16.mxu0 0
        %1706 = vmatpush1.bf16.msra.mxu0 0
        %1707 = vmatprep.subr.bf16.mxu0 0
        %1708 = vmatpush1.bf16.msra.mxu0 0
        %1709 = vmatprep.subr.bf16.mxu0 0
        %1710 = vmatpush1.bf16.msra.mxu0 0
        %1711 = vmatprep.mubr.bf16.mxu0 0
        %1712 = vmatmul.mubr.bf16.gmra.mrb[0].mxu0 %v1677
        %v1713 = vpop.f32.mrb[0].mxu0
        %v1714 = vadd.f32 0.0, %v1713
        %v1715 = vpop.f32.mrb[0].mxu0
        %v1716 = vpop.f32.mrb[0].mxu0
        %v1717 = vpop.f32.mrb[0].mxu0
        %1718 = vdwg.mxu0
        %v1720 = vunpack.c.l.b16 %v1293
        %v1721 = vunpack.c.h.b16 %v1293
        %1722 = vset.pattern.permute.xlu0 0
        %1723 = vperm.xlu0 %1722, %v1720
        %v1724 = vpop.permute.xlu0 %1723
        %1725 = vset.pattern.permute.xlu0 0
        %1726 = vperm.xlu0 %1725, %v1721
        %v1727 = vpop.permute.xlu0 %1726
        %v1728 = vlaneseq
        %v1729 = vshrl.u32 %v1728, 7
        %v1730 = vsub.s32 %v900, %v1729
        %v1731 = vrot.slane %v1724, %v1730
        %v1732 = vlaneseq
        %v1733 = vshrl.u32 %v1732, 7
        %v1734 = vsub.s32 %v905, %v1733
        %v1735 = vrot.slane %v1727, %v1734
        %v1736 = vsel %vm910, %v1735, %v1731
        %v1737 = vpack.c.b16 %v1736, %v1736
        %v1740 = vunpack.c.l.b16 %v1307
        %v1741 = vunpack.c.l.b16 %v1308
        %v1742 = vpack.c.b16 %v1741, %v1740
        %v1745 = vsel %vm815, %v1737, 0
        %1747 = vmatprep.subr.bf16.mxu0 0
        %1748 = vmatpush1.bf16.msra.mxu0 %v1742
        %1749 = vmatprep.subr.bf16.mxu0 0
        %1750 = vmatpush1.bf16.msra.mxu0 0
        %1751 = vmatprep.subr.bf16.mxu0 0
        %1752 = vmatpush1.bf16.msra.mxu0 0
        %1753 = vmatprep.subr.bf16.mxu0 0
        %1754 = vmatpush1.bf16.msra.mxu0 0
        %1755 = vmatprep.subr.bf16.mxu0 0
        %1756 = vmatpush1.bf16.msra.mxu0 0
        %1757 = vmatprep.subr.bf16.mxu0 0
        %1758 = vmatpush1.bf16.msra.mxu0 0
        %1759 = vmatprep.subr.bf16.mxu0 0
        %1760 = vmatpush1.bf16.msra.mxu0 0
        %1761 = vmatprep.subr.bf16.mxu0 0
        %1762 = vmatpush1.bf16.msra.mxu0 0
        %1763 = vmatprep.subr.bf16.mxu0 0
        %1764 = vmatpush1.bf16.msra.mxu0 0
        %1765 = vmatprep.subr.bf16.mxu0 0
        %1766 = vmatpush1.bf16.msra.mxu0 0
        %1767 = vmatprep.subr.bf16.mxu0 0
        %1768 = vmatpush1.bf16.msra.mxu0 0
        %1769 = vmatprep.subr.bf16.mxu0 0
        %1770 = vmatpush1.bf16.msra.mxu0 0
        %1771 = vmatprep.subr.bf16.mxu0 0
        %1772 = vmatpush1.bf16.msra.mxu0 0
        %1773 = vmatprep.subr.bf16.mxu0 0
        %1774 = vmatpush1.bf16.msra.mxu0 0
        %1775 = vmatprep.subr.bf16.mxu0 0
        %1776 = vmatpush1.bf16.msra.mxu0 0
        %1777 = vmatprep.subr.bf16.mxu0 0
        %1778 = vmatpush1.bf16.msra.mxu0 0
        %1779 = vmatprep.mubr.bf16.mxu0 0
        %1780 = vmatmul.mubr.bf16.gmra.mrb[0].mxu0 %v1745
        %v1781 = vpop.f32.mrb[0].mxu0
        %v1782 = vadd.f32 0.0, %v1781
        %v1783 = vpop.f32.mrb[0].mxu0
        %v1784 = vpop.f32.mrb[0].mxu0
        %v1785 = vpop.f32.mrb[0].mxu0
        %1786 = vdwg.mxu0
        %v1788 = vunpack.c.l.b16 %v1294
        %v1789 = vunpack.c.h.b16 %v1294
        %1790 = vset.pattern.permute.xlu0 0
        %1791 = vperm.xlu0 %1790, %v1788
        %v1792 = vpop.permute.xlu0 %1791
        %1793 = vset.pattern.permute.xlu0 0
        %1794 = vperm.xlu0 %1793, %v1789
        %v1795 = vpop.permute.xlu0 %1794
        %v1796 = vlaneseq
        %v1797 = vshrl.u32 %v1796, 7
        %v1798 = vsub.s32 %v900, %v1797
        %v1799 = vrot.slane %v1792, %v1798
        %v1800 = vlaneseq
        %v1801 = vshrl.u32 %v1800, 7
        %v1802 = vsub.s32 %v905, %v1801
        %v1803 = vrot.slane %v1795, %v1802
        %v1804 = vsel %vm910, %v1803, %v1799
        %v1805 = vpack.c.b16 %v1804, %v1804
        %v1808 = vunpack.c.l.b16 %v1309
        %v1809 = vunpack.c.l.b16 %v1310
        %v1810 = vpack.c.b16 %v1809, %v1808
        %v1813 = vsel %vm815, %v1805, 0
        %1815 = vmatprep.subr.bf16.mxu0 0
        %1816 = vmatpush1.bf16.msra.mxu0 %v1810
        %1817 = vmatprep.subr.bf16.mxu0 0
        %1818 = vmatpush1.bf16.msra.mxu0 0
        %1819 = vmatprep.subr.bf16.mxu0 0
        %1820 = vmatpush1.bf16.msra.mxu0 0
        %1821 = vmatprep.subr.bf16.mxu0 0
        %1822 = vmatpush1.bf16.msra.mxu0 0
        %1823 = vmatprep.subr.bf16.mxu0 0
        %1824 = vmatpush1.bf16.msra.mxu0 0
        %1825 = vmatprep.subr.bf16.mxu0 0
        %1826 = vmatpush1.bf16.msra.mxu0 0
        %1827 = vmatprep.subr.bf16.mxu0 0
        %1828 = vmatpush1.bf16.msra.mxu0 0
        %1829 = vmatprep.subr.bf16.mxu0 0
        %1830 = vmatpush1.bf16.msra.mxu0 0
        %1831 = vmatprep.subr.bf16.mxu0 0
        %1832 = vmatpush1.bf16.msra.mxu0 0
        %1833 = vmatprep.subr.bf16.mxu0 0
        %1834 = vmatpush1.bf16.msra.mxu0 0
        %1835 = vmatprep.subr.bf16.mxu0 0
        %1836 = vmatpush1.bf16.msra.mxu0 0
        %1837 = vmatprep.subr.bf16.mxu0 0
        %1838 = vmatpush1.bf16.msra.mxu0 0
        %1839 = vmatprep.subr.bf16.mxu0 0
        %1840 = vmatpush1.bf16.msra.mxu0 0
        %1841 = vmatprep.subr.bf16.mxu0 0
        %1842 = vmatpush1.bf16.msra.mxu0 0
        %1843 = vmatprep.subr.bf16.mxu0 0
        %1844 = vmatpush1.bf16.msra.mxu0 0
        %1845 = vmatprep.subr.bf16.mxu0 0
        %1846 = vmatpush1.bf16.msra.mxu0 0
        %1847 = vmatprep.mubr.bf16.mxu0 0
        %1848 = vmatmul.mubr.bf16.gmra.mrb[0].mxu0 %v1813
        %v1849 = vpop.f32.mrb[0].mxu0
        %v1850 = vadd.f32 0.0, %v1849
        %v1851 = vpop.f32.mrb[0].mxu0
        %v1852 = vpop.f32.mrb[0].mxu0
        %v1853 = vpop.f32.mrb[0].mxu0
        %1854 = vdwg.mxu0
        %v1855 = vld [vmem:[%s9] sm:$0xf]
        %v1856 = vld [vmem:[%s9 + $0x4] sm:$0xf]
        %v1857 = vld [vmem:[%s9 + $0x8] sm:$0xf]
        %v1858 = vld [vmem:[%s9 + $0xc] sm:$0xf]
        %v1859 = vld [vmem:[%s10] sm:$0x1]
        %v1861 = vlaneseq
        %v1862 = vshrl.u32 %v1861, 7
        %v1863 = vsub.s32 0, %v1862
        %v1864 = vrot.slane %v1859, %v1863
        %v1870 = vunpack.c.l.b16 %v1855
        %v1871 = vunpack.c.l.b16 %v1856
        %v1872 = vunpack.c.l.b16 %v1857
        %v1873 = vunpack.c.l.b16 %v1858
        %v1874 = vpack.c.b16 %v1871, %v1870
        %v1875 = vpack.c.b16 %v1873, %v1872
        %1878 = vmatprep.subr.bf16.mxu0 0
        %1879 = vmatpush1.bf16.msra.mxu0 %v1874
        %1880 = vmatprep.subr.bf16.mxu0 0
        %1881 = vmatpush1.bf16.msra.mxu0 %v1875
        %1882 = vmatprep.subr.bf16.mxu0 0
        %1883 = vmatpush1.bf16.msra.mxu0 0
        %1884 = vmatprep.subr.bf16.mxu0 0
        %1885 = vmatpush1.bf16.msra.mxu0 0
        %1886 = vmatprep.subr.bf16.mxu0 0
        %1887 = vmatpush1.bf16.msra.mxu0 0
        %1888 = vmatprep.subr.bf16.mxu0 0
        %1889 = vmatpush1.bf16.msra.mxu0 0
        %1890 = vmatprep.subr.bf16.mxu0 0
        %1891 = vmatpush1.bf16.msra.mxu0 0
        %1892 = vmatprep.subr.bf16.mxu0 0
        %1893 = vmatpush1.bf16.msra.mxu0 0
        %1894 = vmatprep.subr.bf16.mxu0 0
        %1895 = vmatpush1.bf16.msra.mxu0 0
        %1896 = vmatprep.subr.bf16.mxu0 0
        %1897 = vmatpush1.bf16.msra.mxu0 0
        %1898 = vmatprep.subr.bf16.mxu0 0
        %1899 = vmatpush1.bf16.msra.mxu0 0
        %1900 = vmatprep.subr.bf16.mxu0 0
        %1901 = vmatpush1.bf16.msra.mxu0 0
        %1902 = vmatprep.subr.bf16.mxu0 0
        %1903 = vmatpush1.bf16.msra.mxu0 0
        %1904 = vmatprep.subr.bf16.mxu0 0
        %1905 = vmatpush1.bf16.msra.mxu0 0
        %1906 = vmatprep.subr.bf16.mxu0 0
        %1907 = vmatpush1.bf16.msra.mxu0 0
        %1908 = vmatprep.subr.bf16.mxu0 0
        %1909 = vmatpush1.bf16.msra.mxu0 0
        %1910 = vmatprep.mubr.bf16.mxu0 0
        %1911 = vmatmul.mubr.bf16.gmra.mrb[0].mxu0 %v612
        %v1912 = vpop.f32.mrb[0].mxu0
        %v1913 = vadd.f32 %v1864, %v1912
        %v1914 = vpop.f32.mrb[0].mxu0
        %v1915 = vpop.f32.mrb[0].mxu0
        %v1916 = vpop.f32.mrb[0].mxu0
        %1917 = vdwg.mxu0
        %v1918 = vxor.u32 %v1913, 2147483648
        %v1919 = vmul.f32 %v1918, 1.442695
        %v1920 = vpow.pop %v1919
        %v1921 = vadd.f32 %v1920, 1.0
        %v1922 = vrcp.pop %v1921
        %v1923 = vmul.f32 1.0, %v1922
        %v1932 = vrot.slane %v1442, 7
        %v1933 = vsel %vm975, %v1932, %v1374
        %v1934 = vrot.slane %v1510, 6
        %v1935 = vsel %vm977, %v1934, %v1933
        %v1936 = vrot.slane %v1578, 5
        %v1937 = vsel %vm979, %v1936, %v1935
        %v1938 = vrot.slane %v1646, 4
        %v1939 = vsel %vm981, %v1938, %v1937
        %v1940 = vrot.slane %v1714, 3
        %v1941 = vsel %vm983, %v1940, %v1939
        %v1942 = vrot.slane %v1782, 2
        %v1943 = vsel %vm985, %v1942, %v1941
        %v1944 = vrot.slane %v1850, 1
        %v1945 = vsel %vm987, %v1944, %v1943
        %v1947 = vmul.f32 %v1923, %v1945
        %v1948 = vld [vmem:[%s523] sm:$0xff]
        %v1949 = vpack.c.bf16 %v1947, %v1947
        %v1950 = vld [vmem:[%s11] sm:$0xf]
        %v1951 = vld [vmem:[%s11 + $0x4] sm:$0xf]
        %v1952 = vld [vmem:[%s11 + $0x8] sm:$0xf]
        %v1953 = vld [vmem:[%s11 + $0xc] sm:$0xf]
        %v1958 = vunpack.c.l.b16 %v1950
        %v1959 = vunpack.c.l.b16 %v1951
        %v1960 = vunpack.c.l.b16 %v1952
        %v1961 = vunpack.c.l.b16 %v1953
        %v1962 = vpack.c.b16 %v1959, %v1958
        %v1963 = vpack.c.b16 %v1961, %v1960
        %v1967 = vsel %vm610, %v1949, 0
        %1969 = vmatprep.subr.bf16.mxu0 0
        %1970 = vmatpush1.bf16.msra.mxu0 %v1962
        %1971 = vmatprep.subr.bf16.mxu0 0
        %1972 = vmatpush1.bf16.msra.mxu0 %v1963
        %1973 = vmatprep.subr.bf16.mxu0 0
        %1974 = vmatpush1.bf16.msra.mxu0 0
        %1975 = vmatprep.subr.bf16.mxu0 0
        %1976 = vmatpush1.bf16.msra.mxu0 0
        %1977 = vmatprep.subr.bf16.mxu0 0
        %1978 = vmatpush1.bf16.msra.mxu0 0
        %1979 = vmatprep.subr.bf16.mxu0 0
        %1980 = vmatpush1.bf16.msra.mxu0 0
        %1981 = vmatprep.subr.bf16.mxu0 0
        %1982 = vmatpush1.bf16.msra.mxu0 0
        %1983 = vmatprep.subr.bf16.mxu0 0
        %1984 = vmatpush1.bf16.msra.mxu0 0
        %1985 = vmatprep.subr.bf16.mxu0 0
        %1986 = vmatpush1.bf16.msra.mxu0 0
        %1987 = vmatprep.subr.bf16.mxu0 0
        %1988 = vmatpush1.bf16.msra.mxu0 0
        %1989 = vmatprep.subr.bf16.mxu0 0
        %1990 = vmatpush1.bf16.msra.mxu0 0
        %1991 = vmatprep.subr.bf16.mxu0 0
        %1992 = vmatpush1.bf16.msra.mxu0 0
        %1993 = vmatprep.subr.bf16.mxu0 0
        %1994 = vmatpush1.bf16.msra.mxu0 0
        %1995 = vmatprep.subr.bf16.mxu0 0
        %1996 = vmatpush1.bf16.msra.mxu0 0
        %1997 = vmatprep.subr.bf16.mxu0 0
        %1998 = vmatpush1.bf16.msra.mxu0 0
        %1999 = vmatprep.subr.bf16.mxu0 0
        %2000 = vmatpush1.bf16.msra.mxu0 0
        %2001 = vmatprep.mubr.bf16.mxu0 0
        %2002 = vmatmul.mubr.bf16.gmra.mrb[0].mxu0 %v1967
        %v2003 = vpop.f32.mrb[0].mxu0
        %v2004 = vadd.f32 0.0, %v2003
        %v2005 = vpop.f32.mrb[0].mxu0
        %v2006 = vpop.f32.mrb[0].mxu0
        %v2007 = vpop.f32.mrb[0].mxu0
        %2008 = vdwg.mxu0
        %v2009 = vadd.f32 %v1948, %v2004
        %v2010 = vld [vmem:[%s12] sm:$0xf]
        %v2011 = vld [vmem:[%s12 + $0x4] sm:$0xf]
        %v2012 = vld [vmem:[%s12 + $0x8] sm:$0xf]
        %v2013 = vld [vmem:[%s12 + $0xc] sm:$0xf]
        %v2018 = vunpack.c.l.b16 %v2010
        %v2019 = vunpack.c.l.b16 %v2011
        %v2020 = vunpack.c.l.b16 %v2012
        %v2021 = vunpack.c.l.b16 %v2013
        %v2022 = vpack.c.b16 %v2019, %v2018
        %v2023 = vpack.c.b16 %v2021, %v2020
        %2026 = vmatprep.subr.bf16.mxu0 0
        %2027 = vmatpush1.bf16.msra.mxu0 %v2022
        %2028 = vmatprep.subr.bf16.mxu0 0
        %2029 = vmatpush1.bf16.msra.mxu0 %v2023
        %2030 = vmatprep.subr.bf16.mxu0 0
        %2031 = vmatpush1.bf16.msra.mxu0 0
        %2032 = vmatprep.subr.bf16.mxu0 0
        %2033 = vmatpush1.bf16.msra.mxu0 0
        %2034 = vmatprep.subr.bf16.mxu0 0
        %2035 = vmatpush1.bf16.msra.mxu0 0
        %2036 = vmatprep.subr.bf16.mxu0 0
        %2037 = vmatpush1.bf16.msra.mxu0 0
        %2038 = vmatprep.subr.bf16.mxu0 0
        %2039 = vmatpush1.bf16.msra.mxu0 0
        %2040 = vmatprep.subr.bf16.mxu0 0
        %2041 = vmatpush1.bf16.msra.mxu0 0
        %2042 = vmatprep.subr.bf16.mxu0 0
        %2043 = vmatpush1.bf16.msra.mxu0 0
        %2044 = vmatprep.subr.bf16.mxu0 0
        %2045 = vmatpush1.bf16.msra.mxu0 0
        %2046 = vmatprep.subr.bf16.mxu0 0
        %2047 = vmatpush1.bf16.msra.mxu0 0
        %2048 = vmatprep.subr.bf16.mxu0 0
        %2049 = vmatpush1.bf16.msra.mxu0 0
        %2050 = vmatprep.subr.bf16.mxu0 0
        %2051 = vmatpush1.bf16.msra.mxu0 0
        %2052 = vmatprep.subr.bf16.mxu0 0
        %2053 = vmatpush1.bf16.msra.mxu0 0
        %2054 = vmatprep.subr.bf16.mxu0 0
        %2055 = vmatpush1.bf16.msra.mxu0 0
        %2056 = vmatprep.subr.bf16.mxu0 0
        %2057 = vmatpush1.bf16.msra.mxu0 0
        %2058 = vmatprep.mubr.bf16.mxu0 0
        %2059 = vmatmul.mubr.bf16.gmra.mrb[0].mxu0 %v612
        %v2060 = vpop.f32.mrb[0].mxu0
        %v2061 = vadd.f32 0.0, %v2060
        %v2062 = vpop.f32.mrb[0].mxu0
        %v2063 = vpop.f32.mrb[0].mxu0
        %v2064 = vpop.f32.mrb[0].mxu0
        %2065 = vdwg.mxu0
        %v2066 = vadd.f32 %v2009, %v2061
        %v2067 = vxor.u32 %v2066, 2147483648
        %v2068 = vmul.f32 %v2067, 1.442695
        %v2069 = vpow.pop %v2068
        %v2070 = vadd.f32 %v2069, 1.0
        %v2071 = vrcp.pop %v2070
        %v2072 = vmul.f32 1.0, %v2071
        %v2073 = vtanh.pop %v2066
        %2075 = vrot.lane.b32.xlu0 %v592, 32
        %v2076 = vpop.permute.xlu0 %2075
        %v2078 = vmul.f32 %v2072, %v2076
        %2080 = vrot.lane.b32.xlu0 %v2073, 64
        %v2081 = vpop.permute.xlu0 %2080
        %v2083 = vmul.f32 %v2072, %v2081
        %2085 = vrot.lane.b32.xlu0 %v2083, 32
        %v2086 = vpop.permute.xlu0 %2085
        %v2088 = vadd.f32 %v2078, %v2086
        %v2089 = vtanh.pop %v2088
        %2091 = vrot.lane.b32.xlu0 %v2089, 64
        %v2092 = vpop.permute.xlu0 %2091
        %v2094 = vmul.f32 %v2072, %v2092
        %s2095 = sld [smem:[#allocation5 + %s48]]
        %v2096 = vlaneseq
        %v2097 = vshrl.u32 %v2096, 7
        %s2098 = smul.u32 %s47, 8
        %v2099 = vstv %s2098
        %v2100 = vadd.s32 %v2097, %v2099
        %v2101 = vstv %s2095
        %vm2102 = vcmp.lt.s32.totalorder %v2100, %v2101
        %v2103 = vsel %vm2102, 1, 0
        %vm2104 = vcmp.eq.s32.totalorder %v2103, 1
        %2106 = vrot.lane.b32.xlu0 %v591, 96
        %v2107 = vpop.permute.xlu0 %2106
        %v2109 = vsel %vm2104, %v2094, %v2107
        %v2110 = vsel %vm2104, %v2088, %v2076
        %2112 = vrot.lane.b32.xlu0 %v2109, 32
        %v2113 = vpop.permute.xlu0 %2112
        %2115 = vst.msk [vmem:[#allocation2] sm:$0xff] %vm610, %v2113
        %2117 = vrot.lane.b32.xlu0 %v2110, 96
        %v2118 = vpop.permute.xlu0 %2117
        %2120 = vst.msk [vmem:[#allocation3] sm:$0xff] %vm610, %v2118
        %2121 = vst.msk [vmem:[%s571] sm:$0xff] %vm610, %v2113
        %2138 = vset.pattern.permute.xlu0 0
        %2139 = vperm.xlu0 %2138, %v1271
        %v2140 = vpop.permute.xlu0 %2139
        %2141 = vset.pattern.permute.xlu0 0
        %2142 = vperm.xlu0 %2141, %v1272
        %v2143 = vpop.permute.xlu0 %2142
        %2144 = vset.pattern.permute.xlu0 0
        %2145 = vperm.xlu0 %2144, %v1273
        %v2146 = vpop.permute.xlu0 %2145
        %2147 = vset.pattern.permute.xlu0 0
        %2148 = vperm.xlu0 %2147, %v1274
        %v2149 = vpop.permute.xlu0 %2148
        %2150 = vset.pattern.permute.xlu0 0
        %2151 = vperm.xlu0 %2150, %v1275
        %v2152 = vpop.permute.xlu0 %2151
        %2153 = vset.pattern.permute.xlu0 0
        %2154 = vperm.xlu0 %2153, %v1276
        %v2155 = vpop.permute.xlu0 %2154
        %2156 = vset.pattern.permute.xlu0 0
        %2157 = vperm.xlu0 %2156, %v1277
        %v2158 = vpop.permute.xlu0 %2157
        %2159 = vset.pattern.permute.xlu0 0
        %2160 = vperm.xlu0 %2159, %v1278
        %v2161 = vpop.permute.xlu0 %2160
        %2162 = vset.pattern.permute.xlu0 0
        %2163 = vperm.xlu0 %2162, %v1279
        %v2164 = vpop.permute.xlu0 %2163
        %2165 = vset.pattern.permute.xlu0 0
        %2166 = vperm.xlu0 %2165, %v1280
        %v2167 = vpop.permute.xlu0 %2166
        %2168 = vset.pattern.permute.xlu0 0
        %2169 = vperm.xlu0 %2168, %v1281
        %v2170 = vpop.permute.xlu0 %2169
        %2171 = vset.pattern.permute.xlu0 0
        %2172 = vperm.xlu0 %2171, %v1282
        %v2173 = vpop.permute.xlu0 %2172
        %2174 = vset.pattern.permute.xlu0 0
        %2175 = vperm.xlu0 %2174, %v1283
        %v2176 = vpop.permute.xlu0 %2175
        %2177 = vset.pattern.permute.xlu0 0
        %2178 = vperm.xlu0 %2177, %v1284
        %v2179 = vpop.permute.xlu0 %2178
        %2180 = vset.pattern.permute.xlu0 0
        %2181 = vperm.xlu0 %2180, %v1285
        %v2182 = vpop.permute.xlu0 %2181
        %2183 = vset.pattern.permute.xlu0 0
        %2184 = vperm.xlu0 %2183, %v1286
        %v2185 = vpop.permute.xlu0 %2184
        %v2186 = vlaneseq
        %v2187 = vshrl.u32 %v2186, 7
        %v2188 = vsub.s32 %v900, %v2187
        %v2189 = vrot.slane %v2140, %v2188
        %v2190 = vlaneseq
        %v2191 = vshrl.u32 %v2190, 7
        %v2192 = vsub.s32 %v905, %v2191
        %v2193 = vrot.slane %v2143, %v2192
        %v2194 = vsel %vm910, %v2193, %v2189
        %v2195 = vlaneseq
        %v2196 = vshrl.u32 %v2195, 7
        %v2197 = vsub.s32 %v900, %v2196
        %v2198 = vrot.slane %v2146, %v2197
        %v2199 = vlaneseq
        %v2200 = vshrl.u32 %v2199, 7
        %v2201 = vsub.s32 %v905, %v2200
        %v2202 = vrot.slane %v2149, %v2201
        %v2203 = vsel %vm910, %v2202, %v2198
        %v2204 = vlaneseq
        %v2205 = vshrl.u32 %v2204, 7
        %v2206 = vsub.s32 %v900, %v2205
        %v2207 = vrot.slane %v2152, %v2206
        %v2208 = vlaneseq
        %v2209 = vshrl.u32 %v2208, 7
        %v2210 = vsub.s32 %v905, %v2209
        %v2211 = vrot.slane %v2155, %v2210
        %v2212 = vsel %vm910, %v2211, %v2207
        %v2213 = vlaneseq
        %v2214 = vshrl.u32 %v2213, 7
        %v2215 = vsub.s32 %v900, %v2214
        %v2216 = vrot.slane %v2158, %v2215
        %v2217 = vlaneseq
        %v2218 = vshrl.u32 %v2217, 7
        %v2219 = vsub.s32 %v905, %v2218
        %v2220 = vrot.slane %v2161, %v2219
        %v2221 = vsel %vm910, %v2220, %v2216
        %v2222 = vlaneseq
        %v2223 = vshrl.u32 %v2222, 7
        %v2224 = vsub.s32 %v900, %v2223
        %v2225 = vrot.slane %v2164, %v2224
        %v2226 = vlaneseq
        %v2227 = vshrl.u32 %v2226, 7
        %v2228 = vsub.s32 %v905, %v2227
        %v2229 = vrot.slane %v2167, %v2228
        %v2230 = vsel %vm910, %v2229, %v2225
        %v2231 = vlaneseq
        %v2232 = vshrl.u32 %v2231, 7
        %v2233 = vsub.s32 %v900, %v2232
        %v2234 = vrot.slane %v2170, %v2233
        %v2235 = vlaneseq
        %v2236 = vshrl.u32 %v2235, 7
        %v2237 = vsub.s32 %v905, %v2236
        %v2238 = vrot.slane %v2173, %v2237
        %v2239 = vsel %vm910, %v2238, %v2234
        %v2240 = vlaneseq
        %v2241 = vshrl.u32 %v2240, 7
        %v2242 = vsub.s32 %v900, %v2241
        %v2243 = vrot.slane %v2176, %v2242
        %v2244 = vlaneseq
        %v2245 = vshrl.u32 %v2244, 7
        %v2246 = vsub.s32 %v905, %v2245
        %v2247 = vrot.slane %v2179, %v2246
        %v2248 = vsel %vm910, %v2247, %v2243
        %v2249 = vlaneseq
        %v2250 = vshrl.u32 %v2249, 7
        %v2251 = vsub.s32 %v900, %v2250
        %v2252 = vrot.slane %v2182, %v2251
        %v2253 = vlaneseq
        %v2254 = vshrl.u32 %v2253, 7
        %v2255 = vsub.s32 %v905, %v2254
        %v2256 = vrot.slane %v2185, %v2255
        %v2257 = vsel %vm910, %v2256, %v2252
        %v2258 = vsel %vm975, %v2203, %v2194
        %v2259 = vsel %vm977, %v2212, %v2258
        %v2260 = vsel %vm979, %v2221, %v2259
        %v2261 = vsel %vm981, %v2230, %v2260
        %v2262 = vsel %vm983, %v2239, %v2261
        %v2263 = vsel %vm985, %v2248, %v2262
        %v2264 = vsel %vm987, %v2257, %v2263
        %v2266 = vsel %vm2104, %v2264, 0.0
        %2267 = vst.msk [vmem:[%s578] sm:$0xff] %vm815, %v2266
        %s2268 = sand.u32 %s344, 1
        %s2269 = scalar_lea.sflag [#allocation9], %s2268
        %s2270 = sand.u32 %s344, 1
        %s2271 = smul.addr %s2270, 8
        %s2272 = scalar_lea.vmem [#allocation16], %s2271
        %s2273 = sand.u32 %s372, 1
        %s2274 = scalar_lea.sflag [#allocation18], %s2273
        %s2275 = sand.u32 %s372, 1
        %s2276 = smul.addr %s2275, 8
        %s2277 = scalar_lea.vmem [#allocation17], %s2276
        // Predicated region
        $region93: #{tpu_custom_call.1} parent=67 // pred_check
          %p2278 = pneg %p354
        $region94: #{tpu_custom_call.1} parent=67 // pred_check_branch
          %2280 = sbr.rel (%p2278) target = $region96
        $region95: #{tpu_custom_call.1} parent=67 // pred_region
          %s2282 = ssub.s32 128, 128
          %2283 = vsyncadd %s2269, %s2282
          %s2284 = sadd.s32 %s47, %s48
          %s2285 = smul.addr %s2284, 128
          %s2286 = scalar_lea.hbm %s13, %s2285
          %s2288 = sshll.u32 %s2272, 4
          %s2289 = int_to_ptr.vmem [resolvable:$true] %s2288
          %2291 = dma.vmem_to_hbm [thread:$0]  %s2289, 128, %s2286, %s2269
        $region96: #{tpu_custom_call.1} parent=67 // pred_fallthru
          _
        // Predicated region
        $region97: #{tpu_custom_call.1} parent=67 // pred_check
          %p2292 = pneg %p382
        $region98: #{tpu_custom_call.1} parent=67 // pred_check_branch
          %2294 = sbr.rel (%p2292) target = $region100
        $region99: #{tpu_custom_call.1} parent=67 // pred_region
          %s2296 = ssub.s32 128, 128
          %2297 = vsyncadd %s2274, %s2296
          %s2298 = sadd.s32 %s47, %s48
          %s2299 = smul.addr %s2298, 128
          %s2300 = scalar_lea.hbm %s14, %s2299
          %s2302 = sshll.u32 %s2277, 4
          %s2303 = int_to_ptr.vmem [resolvable:$true] %s2302
          %2305 = dma.vmem_to_hbm [thread:$0]  %s2303, 128, %s2300, %s2274
        $region100: #{tpu_custom_call.1} parent=67 // pred_fallthru
          _
      $region68: #{tpu_custom_call.1} parent=5 // pred_fallthru
        _
      %p2306 = scmp.le.s32.totalorder 2, %s38
      // Predicated region
      $region101: #{tpu_custom_call.1} parent=5 // pred_check
        %p2307 = pneg %p2306
      $region102: #{tpu_custom_call.1} parent=5 // pred_check_branch
        %2309 = sbr.rel (%p2307) target = $region104
      $region103: #{tpu_custom_call.1} parent=5 // pred_region
        %s2310 = ssub.s32 %s38, 2
        // Predicated region
        $region105: #{tpu_custom_call.1} parent=103 // pred_check
          %p2311 = pneg %p360
        $region106: #{tpu_custom_call.1} parent=103 // pred_check_branch
          %2313 = sbr.rel (%p2311) target = $region108
        $region107: #{tpu_custom_call.1} parent=103 // pred_region
          %s2314 = sand.u32 %s345, 1
          %s2315 = scalar_lea.sflag [#allocation9], %s2314
          %s2316 = sand.u32 %s345, 1
          %s2317 = smul.addr %s2316, 8
          %s2318 = scalar_lea.vmem [#allocation16], %s2317
          %2319 = dma.done %s2315, 128
        $region108: #{tpu_custom_call.1} parent=103 // pred_fallthru
          _
        // Predicated region
        $region109: #{tpu_custom_call.1} parent=103 // pred_check
          %p2320 = pneg %p388
        $region110: #{tpu_custom_call.1} parent=103 // pred_check_branch
          %2322 = sbr.rel (%p2320) target = $region112
        $region111: #{tpu_custom_call.1} parent=103 // pred_region
          %s2323 = sand.u32 %s373, 1
          %s2324 = scalar_lea.sflag [#allocation18], %s2323
          %s2325 = sand.u32 %s373, 1
          %s2326 = smul.addr %s2325, 8
          %s2327 = scalar_lea.vmem [#allocation17], %s2326
          %2328 = dma.done %s2324, 128
        $region112: #{tpu_custom_call.1} parent=103 // pred_fallthru
          _
      $region104: #{tpu_custom_call.1} parent=5 // pred_fallthru
        _
    $region6: #{tpu_custom_call.1} parent=1 // loop_footer
      %s42 = sadd.s32 1, %s38
    $region7: #{tpu_custom_call.1} parent=1 // loop_footer_branch
      %37 = sbr.rel target = $region3
    $region8: #{tpu_custom_call.1} parent=1 // loop_exit
      _
    %2329 = vsyncpa [#allocation8], 1
    %s2330 = scalar_lea.sflag [#allocation8], 1
    %2331 = vsyncpa %s2330, 1
    %2332 = vsyncpa [#allocation11], 1
    %2333 = vsyncpa [#allocation15], 1
    %2334 = vsyncpa [#allocation9], 1
    %s2335 = scalar_lea.sflag [#allocation9], 1
    %2336 = vsyncpa %s2335, 1
    %2337 = vsyncpa [#allocation18], 1
    %s2338 = scalar_lea.sflag [#allocation18], 1
    %2339 = vsyncpa %s2338, 1

</llo_original>
